<compile_context>
chip_gen: v7x
topology: tpu7x:2x2x1
jax: 0.10.0
libtpu: 0.0.40
codegen_flags: <defaults>
</compile_context>

<pallas_src>
import functools

import jax
import jax.numpy as jnp
from jax.experimental import pallas as pl
from jax.experimental.pallas import tpu as pltpu


def _round_up(x, m):
    return ((x + m - 1) // m) * m


def _vmem_limit_bytes():
    cap = 64 * 1024 * 1024
    try:
        info = pltpu.get_tpu_info()
        cap = int(getattr(info, "vmem_capacity_bytes", cap))
    except Exception:
        pass
    # leave headroom: 64 MiB chips (v7x) -> 48 MiB, 128 MiB chips -> 100 MiB
    return int(max(32 * 1024 * 1024,
                   min(cap - 16 * 1024 * 1024, 100 * 1024 * 1024)))


def _choose_tb(B, Npad):
    """Batch tile: >=2 tiles for large B (v7x megacore) and bounded score-plane size."""
    cap = max(8, min(128, ((1 << 17) // max(Npad, 128)) // 8 * 8))
    if B > 8:
        return min(cap, _round_up((B + 1) // 2, 8))
    return _round_up(max(B, 1), 8)


# ----------------------------------------------------------------------------
# Pallas kernel: everything after the embedding gathers, up to log_softmax.
# ----------------------------------------------------------------------------
def agent_score_kernel(
    slab_ref,      # [TB, LK+QK] f32 packed per-row inputs
    nb_ref,        # [TB, ent+rel, Npad] bf16 (nb_ent | nb_rel along sublanes)
    mask_ref,      # [TB, Npad] f32: -1e10 pad, 0 hist-masked, 1 keep
    w_lstm_ref,    # [LK, 4H] bf16 fused LSTM weight (noop/pad rows are zero)
    b_lstm_ref,    # [1, 4H] f32
    w1q_ref,       # [QK, hid] bf16 (cx rows zero)
    w1h_ref,       # [H, hid] bf16
    b1_ref,        # [1, hid] f32
    w2_ref,        # [hid, rel+ent] bf16   (cols: relation_output | entities_output)
    b2_ref,        # [1, rel+ent] f32
    whis_ref,      # [1, ent+rel] f32      (his_score_weighted over [q_ent | q_rel])
    bhis_ref,      # [1, 1] f32
    logits_ref,    # OUT [TB, Npad] f32  log_softmax(scores)
    state_ref,     # OUT [TB, SW]   f32  (h | c | don't-care), SW = round_up(2H,128)
    *, use_history, action_dim, state_dim, ent_dim, rel_dim, lstm_k, query_k,
):
    f32, bf16 = jnp.float32, jnp.bfloat16
    A, H = action_dim, state_dim

    slab = slab_ref[...]
    hx = slab[:, A:A + H]
    noop = slab[:, A + H:A + H + 1]
    cx = slab[:, lstm_k:lstm_k + H]
    q_ent = slab[:, lstm_k + H:lstm_k + H + ent_dim]
    q_rel = slab[:, lstm_k + H + ent_dim:lstm_k + H + ent_dim + rel_dim]
    hq = slab[:, lstm_k + H + ent_dim + rel_dim:
              lstm_k + H + ent_dim + rel_dim + ent_dim]

    # ---- HistoryEncoder: fused LSTMCell, ONE [TB,LK]x[LK,4H] bf16 MXU matmul.
    # (w_lstm rows for the noop-flag / pad lanes are zero, so slab[:, :LK] is
    #  exactly the [x | hx] input.)
    gates = (jnp.dot(slab[:, :lstm_k].astype(bf16), w_lstm_ref[...],
                     preferred_element_type=f32) + b_lstm_ref[...])
    i_g = jax.nn.sigmoid(gates[:, 0 * H:1 * H])
    f_g = jax.nn.sigmoid(gates[:, 1 * H:2 * H])
    g_g = jnp.tanh(gates[:, 2 * H:3 * H])
    o_g = jax.nn.sigmoid(gates[:, 3 * H:4 * H])
    c_new = f_g * cx + i_g * g_g
    h_new = o_g * jnp.tanh(c_new)
    keep_old = noop > 0.0                       # [TB,1] -> broadcast over H
    h_out = jnp.where(keep_old, hx, h_new)
    c_out = jnp.where(keep_old, cx, c_new)

    # single lane-dense state output slab (tail lanes are don't-care)
    state_ref[:, 0:H] = h_out
    state_ref[:, H:2 * H] = c_out

    # ---- PolicyMLP: fused query-block dot (cx rows zeroed in w1q) + h_out dot.
    q_in = slab[:, lstm_k:lstm_k + query_k].astype(bf16)
    hidden = jnp.maximum(
        jnp.dot(q_in, w1q_ref[...], preferred_element_type=f32)
        + jnp.dot(h_out.astype(bf16), w1h_ref[...], preferred_element_type=f32)
        + b1_ref[...], 0.0)
    policy = (jnp.dot(hidden.astype(bf16), w2_ref[...],
                      preferred_element_type=f32) + b2_ref[...])   # [TB, rel+ent]
    relation_output = policy[:, :rel_dim]
    entities_output = policy[:, rel_dim:rel_dim + ent_dim]

    # ---- per-action scores: batched MXU einsums on the lane-dense nb tile.
    nb_e = nb_ref[:, 0:ent_dim, :]                       # [TB, ent, Npad]
    nb_r = nb_ref[:, ent_dim:ent_dim + rel_dim, :]       # [TB, rel, Npad]
    ent_q = jnp.stack([hq, entities_output], axis=1).astype(bf16)            # [TB,2,ent]
    rel_q = jnp.stack([q_rel - h_out, relation_output], axis=1).astype(bf16)  # [TB,2,rel]
    ent_scores = jnp.einsum('bkd,bdn->bkn', ent_q, nb_e,
                            preferred_element_type=f32)  # [TB,2,Npad]
    rel_scores = jnp.einsum('bkd,bdn->bkn', rel_q, nb_r,
                            preferred_element_type=f32)  # [TB,2,Npad]

    ent_hist = ent_scores[:, 0, :]
    ent_score = ent_scores[:, 1, :]
    rel_w = jax.nn.sigmoid(rel_scores[:, 0, :])
    rel_score = rel_scores[:, 1, :]

    scores = rel_w * rel_score + (1.0 - rel_w) * ent_score

    mask = mask_ref[...]           # -1e10 pad, 0 hist-masked, 1 keep
    # NOTE: the reference also computes `a = sigmoid(score_weighted_fc(...))`
    # but never uses it in the returned outputs (dead code) -> omitted here.
    if use_history:                # t == 2 branch (static at trace time)
        b_gate = jax.nn.sigmoid(
            jnp.sum(slab[:, lstm_k + H:lstm_k + H + ent_dim + rel_dim]
                    * whis_ref[...], axis=-1, keepdims=True)
            + bhis_ref[...])                                   # [TB,1]
        scores = scores + b_gate * (jnp.maximum(mask, 0.0) * ent_hist)

    scores = jnp.where(mask < 0.0, -1e10, scores)

    # log_softmax over the lane-dense action axis
    # TODO(synk): for very large Npad, chunk the action axis (flash-style
    # online max/sum) to bound vreg/VMEM pressure of the f32 score planes.
    m = jnp.max(scores, axis=1, keepdims=True)
    sh = scores - m
    lse = jnp.log(jnp.sum(jnp.exp(sh), axis=1, keepdims=True))
    logits_ref[...] = sh - lse


# ----------------------------------------------------------------------------
# Glue: embeddings (gathers), packing, kernel call, sampling, loss.
# ----------------------------------------------------------------------------
def dynamic_embedding(ent_table, w, b, entities, delta_t):
    """DynamicEmbedding.forward: cat(ent_emb(entities), cos(w*dt + b))."""
    e = ent_table[entities]
    t_feat = jnp.cos(delta_t.astype(jnp.float32)[..., None] * w + b)
    return jnp.concatenate([e, t_feat], axis=-1)


def _pack_kernel_weights(params, config):
    """Build the fused / zero-padded bf16 kernel weights from split params."""
    f32, bf16 = jnp.float32, jnp.bfloat16
    ent, rel = config["ent_dim"], config["rel_dim"]
    H, hid = config["state_dim"], config["mlp_hidden_dim"]
    A = ent + rel
    LK = _round_up(A + H, 128)
    QK = _round_up(H + ent + rel + ent, 128)

    w_lstm = jnp.zeros((LK, 4 * H), f32)
    w_lstm = w_lstm.at[:A].set(jnp.moveaxis(params["w_ih"], 0, 1).reshape(A, 4 * H))
    w_lstm = w_lstm.at[A:A + H].set(jnp.moveaxis(params["w_hh"], 0, 1).reshape(H, 4 * H))
    b_lstm = jnp.moveaxis(params["b_gates"], 0, 1).reshape(1, 4 * H)

    w1q = jnp.zeros((QK, hid), f32)                       # rows 0:H (cx) stay zero
    w1q = w1q.at[H:H + ent].set(params["w1_qent"])
    w1q = w1q.at[H + ent:H + ent + rel].set(params["w1_qrel"])
    w1q = w1q.at[H + ent + rel:H + ent + rel + ent].set(params["w1_hq"])

    return dict(
        w_lstm=w_lstm.astype(bf16),
        b_lstm=b_lstm.astype(f32),
        w1q=w1q.astype(bf16),
        w1h=params["w1_lstm"].astype(bf16),
        b1=params["b1"].astype(f32),
        w2=jnp.concatenate([params["w2_rel"], params["w2_ent"]], axis=-1).astype(bf16),
        b2=jnp.concatenate([params["b2_rel"], params["b2_ent"]], axis=-1).astype(f32),
        w_his=jnp.concatenate([params["w_his_ent"], params["w_his_rel"]],
                              axis=-1).astype(f32),
        b_his=params["b_his"].astype(f32),
    )


def agent_forward(params, config, prev_relation, current_entities,
                  current_timestamps, query_relation, query_entity,
                  query_timestamps, action_space, Hq, history_mask, t,
                  sample_key, lstm_state=None):
    f32, bf16 = jnp.float32, jnp.bfloat16
    B = prev_relation.shape[0]
    N = action_space.shape[1]
    ent, rel, H = config["ent_dim"], config["rel_dim"], config["state_dim"]
    A = ent + rel
    NO_OP = config["num_rel"]
    rPAD = config["num_rel"] * 2 + 1
    LK = _round_up(A + H, 128)                 # fused LSTM input width
    QK = _round_up(H + ent + rel + ent, 128)   # fused policy-query input width
    FD = ent + rel                             # fused neighbor feature width
    SW = _round_up(2 * H, 128)                 # lane-dense state output width

    # --- embeddings (plain JAX gathers) ---
    current_delta = query_timestamps - current_timestamps
    current_embds = dynamic_embedding(params["ent_table"], params["dyn_w"],
                                      params["dyn_b"], current_entities,
                                      current_delta)                 # [B, ent]
    prev_rel_embds = params["rel_table"][prev_relation]              # [B, rel]
    prev_action = jnp.concatenate([prev_rel_embds, current_embds], axis=-1).astype(f32)

    neighbors_dt = query_timestamps[:, None] - action_space[:, :, 2]
    nb_ent = dynamic_embedding(params["ent_table"], params["dyn_w"],
                               params["dyn_b"], action_space[:, :, 1],
                               neighbors_dt)                         # [B, N, ent]
    nb_rel = params["rel_table"][action_space[:, :, 0]]              # [B, N, rel]
    # lane-dense neighbor tile: features on sublanes, actions on lanes
    nb_feat = jnp.transpose(
        jnp.concatenate([nb_ent, nb_rel], axis=-1).astype(bf16), (0, 2, 1))  # [B,FD,N]

    # --- single coded mask plane: -1e10 padded action, 0 hist-masked, 1 keep ---
    pad_mask = action_space[:, :, 0] == rPAD
    mask = jnp.where(pad_mask, -1e10,
                     jnp.where(history_mask.astype(bool), 0.0, 1.0)).astype(f32)

    # --- carried LSTM state (HistoryEncoder.set_hiddenx zeros at rollout start)
    noop = (prev_relation == NO_OP).astype(f32)[:, None]
    if lstm_state is None:
        hx = jnp.zeros((B, H), f32)
        cx = jnp.zeros((B, H), f32)
    else:
        hx, cx = lstm_state

    # --- packed per-row slab: [x | hx | noop | 0.. || cx | q_ent | q_rel | hq | 0..]
    parts = [prev_action, hx, noop]
    if LK > A + H + 1:
        parts.append(jnp.zeros((B, LK - (A + H + 1)), f32))
    parts += [cx, query_entity.astype(f32), query_relation.astype(f32), Hq.astype(f32)]
    if QK > H + ent + rel + ent:
        parts.append(jnp.zeros((B, QK - (H + ent + rel + ent)), f32))
    slab = jnp.concatenate(parts, axis=-1)                           # [B, LK+QK]
    SLW = LK + QK

    # --- TPU-friendly padding / tiling ---
    Npad = _round_up(N, 128)
    TB = _choose_tb(B, Npad)
    B_pad = _round_up(B, TB)

    slab_p = jnp.pad(slab, ((0, B_pad - B), (0, 0)))
    nb_p = jnp.pad(nb_feat, ((0, B_pad - B), (0, 0), (0, Npad - N)))
    mask_p = jnp.pad(mask, ((0, B_pad - B), (0, Npad - N)), constant_values=-1e10)

    kw = _pack_kernel_weights(params, config)

    grid = (B_pad // TB,)
    row2 = lambda i: (i, 0)
    row3 = lambda i: (i, 0, 0)
    cst2 = lambda i: (0, 0)     # constant block index -> weights stay VMEM-resident

    in_specs = [
        pl.BlockSpec((TB, SLW), row2),
        pl.BlockSpec((TB, FD, Npad), row3),
        pl.BlockSpec((TB, Npad), row2),
        pl.BlockSpec(kw["w_lstm"].shape, cst2),
        pl.BlockSpec(kw["b_lstm"].shape, cst2),
        pl.BlockSpec(kw["w1q"].shape, cst2),
        pl.BlockSpec(kw["w1h"].shape, cst2),
        pl.BlockSpec(kw["b1"].shape, cst2),
        pl.BlockSpec(kw["w2"].shape, cst2),
        pl.BlockSpec(kw["b2"].shape, cst2),
        pl.BlockSpec(kw["w_his"].shape, cst2),
        pl.BlockSpec(kw["b_his"].shape, cst2),
    ]
    out_specs = (pl.BlockSpec((TB, Npad), row2),
                 pl.BlockSpec((TB, SW), row2))
    out_shape = (jax.ShapeDtypeStruct((B_pad, Npad), f32),
                 jax.ShapeDtypeStruct((B_pad, SW), f32))

    kernel = functools.partial(
        agent_score_kernel, use_history=(t == 2), action_dim=A, state_dim=H,
        ent_dim=ent, rel_dim=rel, lstm_k=LK, query_k=QK)

    logits_p, state_p = pl.pallas_call(
        kernel,
        grid=grid,
        in_specs=in_specs,
        out_specs=out_specs,
        out_shape=out_shape,
        compiler_params=pltpu.CompilerParams(
            dimension_semantics=("parallel",),        # batch tiles -> both TCs on v7x
            vmem_limit_bytes=_vmem_limit_bytes(),
        ),
    )(slab_p, nb_p, mask_p, kw["w_lstm"], kw["b_lstm"], kw["w1q"], kw["w1h"],
      kw["b1"], kw["w2"], kw["b2"], kw["w_his"], kw["b_his"])

    logits = logits_p[:B, :N]
    new_state = (state_p[:B, :H], state_p[:B, H:2 * H])

    # TODO(synk): torch.multinomial RNG is not reproducible in JAX; sampling the
    # same distribution with jax.random.categorical (outside the kernel).
    action_id = jax.random.categorical(sample_key, logits, axis=1).reshape(B, 1)
    loss = -jnp.take_along_axis(logits, action_id, axis=1)[:, 0]
    return loss, logits, action_id, new_state


# ----------------------------------------------------------------------------
# Deterministic parameter init (split-weight layout) + example run.
# ----------------------------------------------------------------------------
def make_params(key, config):
    f32 = jnp.float32
    ent_dim = config["ent_dim"]
    rel_dim = config["rel_dim"]
    state_dim = config["state_dim"]
    time_dim = config["time_dim"]
    num_ent = config["num_ent"]
    action_dim = ent_dim + rel_dim
    hid = config["mlp_hidden_dim"]

    ks = jax.random.split(key, 16)
    s = 0.1
    params = {
        # DynamicEmbedding
        "ent_table": s * jax.random.normal(ks[0], (num_ent + 1, ent_dim - time_dim), f32),
        "dyn_w": (1.0 / 10.0 ** jnp.linspace(0.0, 9.0, time_dim)).astype(f32),
        "dyn_b": jnp.zeros((time_dim,), f32),
        # rel_embs (nn.Embedding(num_ent, rel_dim) in the reference)
        "rel_table": s * jax.random.normal(ks[1], (num_ent, rel_dim), f32),
        # LSTMCell, stored per-gate (i, f, g, o): w_ih[g]:[action_dim,H], w_hh[g]:[H,H]
        "w_ih": s * jax.random.normal(ks[2], (4, action_dim, state_dim), f32),
        "w_hh": s * jax.random.normal(ks[3], (4, state_dim, state_dim), f32),
        # combined per-gate bias (b_ih + b_hh of the torch LSTMCell)
        "b_gates": s * jax.random.normal(ks[4], (4, 1, state_dim), f32),
        # PolicyMLP layer-1, split by input block [lstm_out | q_ent | q_rel | Hq]
        "w1_lstm": s * jax.random.normal(ks[5], (state_dim, hid), f32),
        "w1_qent": s * jax.random.normal(ks[6], (ent_dim, hid), f32),
        "w1_qrel": s * jax.random.normal(ks[7], (rel_dim, hid), f32),
        "w1_hq": s * jax.random.normal(ks[8], (ent_dim, hid), f32),
        "b1": s * jax.random.normal(ks[9], (1, hid), f32),
        # PolicyMLP layer-2, split by output block [relation_output | entities_output]
        "w2_rel": s * jax.random.normal(ks[10], (hid, rel_dim), f32),
        "b2_rel": s * jax.random.normal(ks[11], (1, rel_dim), f32),
        "w2_ent": s * jax.random.normal(ks[12], (hid, ent_dim), f32),
        "b2_ent": s * jax.random.normal(ks[13], (1, ent_dim), f32),
        # his_score_weighted, split by input block [q_ent | q_rel]
        "w_his_ent": s * jax.random.normal(ks[14], (1, ent_dim), f32),
        "w_his_rel": s * jax.random.normal(ks[15], (1, rel_dim), f32),
        "b_his": jnp.zeros((1, 1), f32),
    }
    return params


if __name__ == "__main__":
    config = {
        "num_ent": 20,
        "num_rel": 5,
        "ent_dim": 32,
        "rel_dim": 32,
        "state_dim": 32,
        "time_dim": 8,
        "mlp_hidden_dim": 64,
        "entities_embeds_method": "dynamic",
    }
    B, N = 2, 8
    NO_OP = config["num_rel"]          # 5
    rPAD = config["num_rel"] * 2 + 1   # 11

    root = jax.random.PRNGKey(0)
    kp, k1, k2, k3, k4, k5, k6, k7, k8, k9, ksamp = jax.random.split(root, 11)

    params = make_params(kp, config)

    prev_relation = jnp.array([NO_OP, 3], dtype=jnp.int32)
    current_entities = jax.random.randint(k1, (B,), 0, config["num_ent"] + 1)
    current_timestamps = jax.random.randint(k2, (B,), 0, 10)
    query_timestamps = jax.random.randint(k3, (B,), 5, 15)
    query_relation = jax.random.normal(k4, (B, config["rel_dim"]), jnp.float32)
    query_entity = jax.random.normal(k5, (B, config["ent_dim"]), jnp.float32)

    act_rel = jax.random.randint(k6, (B, N), 0, config["num_rel"] * 2 + 2)
    act_rel = act_rel.at[:, -2:].set(rPAD)   # padded actions at the tail
    act_ent = jax.random.randint(k7, (B, N), 0, config["num_ent"] + 1)
    act_ts = jax.random.randint(k8, (B, N), 0, 10)
    action_space = jnp.stack([act_rel, act_ent, act_ts], axis=-1)  # [B, N, 3]

    Hq = jax.random.normal(k9, (B, config["ent_dim"]), jnp.float32)
    history_mask = jax.random.bernoulli(k9, 0.3, (B, N))
    t = 2

    loss, logits, action_id, lstm_state = agent_forward(
        params, config, prev_relation, current_entities, current_timestamps,
        query_relation, query_entity, query_timestamps, action_space, Hq,
        history_mask, t, ksamp)

    jax.block_until_ready((loss, logits, action_id, lstm_state))
    print("KERNEL_OK")
</pallas_src>

<mosaic_0001>
module attributes {stable_mosaic.version = 11 : i64} {
  func.func @agent_score_kernel(%arg0: i32, %arg1: memref<8x256xf32, #tpu.memory_space<vmem>>, %arg2: memref<8x64x128xbf16, #tpu.memory_space<vmem>>, %arg3: memref<8x128xf32, #tpu.memory_space<vmem>>, %arg4: memref<128x128xbf16, #tpu.memory_space<vmem>>, %arg5: memref<1x128xf32, #tpu.memory_space<vmem>>, %arg6: memref<128x64xbf16, #tpu.memory_space<vmem>>, %arg7: memref<32x64xbf16, #tpu.memory_space<vmem>>, %arg8: memref<1x64xf32, #tpu.memory_space<vmem>>, %arg9: memref<64x64xbf16, #tpu.memory_space<vmem>>, %arg10: memref<1x64xf32, #tpu.memory_space<vmem>>, %arg11: memref<1x64xf32, #tpu.memory_space<vmem>>, %arg12: memref<1x1xf32, #tpu.memory_space<vmem>>, %arg13: memref<8x128xf32, #tpu.memory_space<vmem>>, %arg14: memref<8x128xf32, #tpu.memory_space<vmem>>) attributes {dimension_semantics = [#tpu.dimension_semantics<parallel>], iteration_bounds = array<i64: 1>, scalar_prefetch = 0 : i64, scratch_operands = 0 : i64, tpu.core_type = #tpu.core_type<tc>, window_params = [{transform_indices = @transform_0, window_bounds = array<i64: 8, 256>}, {transform_indices = @transform_1, window_bounds = array<i64: 8, 64, 128>}, {transform_indices = @transform_2, window_bounds = array<i64: 8, 128>}, {pipeline_mode = #tpu.pipeline_mode<synchronous>, transform_indices = @transform_3, window_bounds = array<i64: 128, 128>}, {pipeline_mode = #tpu.pipeline_mode<synchronous>, transform_indices = @transform_4, window_bounds = array<i64: 1, 128>}, {pipeline_mode = #tpu.pipeline_mode<synchronous>, transform_indices = @transform_5, window_bounds = array<i64: 128, 64>}, {pipeline_mode = #tpu.pipeline_mode<synchronous>, transform_indices = @transform_6, window_bounds = array<i64: 32, 64>}, {pipeline_mode = #tpu.pipeline_mode<synchronous>, transform_indices = @transform_7, window_bounds = array<i64: 1, 64>}, {pipeline_mode = #tpu.pipeline_mode<synchronous>, transform_indices = @transform_8, window_bounds = array<i64: 64, 64>}, {pipeline_mode = #tpu.pipeline_mode<synchronous>, transform_indices = @transform_9, window_bounds = array<i64: 1, 64>}, {pipeline_mode = #tpu.pipeline_mode<synchronous>, transform_indices = @transform_10, window_bounds = array<i64: 1, 64>}, {pipeline_mode = #tpu.pipeline_mode<synchronous>, transform_indices = @transform_11, window_bounds = array<i64: 1, 1>}, {transform_indices = @transform_12, window_bounds = array<i64: 8, 128>}, {transform_indices = @transform_13, window_bounds = array<i64: 8, 128>}]} {
    %c0 = arith.constant 0 : index
    %c0_0 = arith.constant 0 : index
    %0 = vector.load %arg1[%c0, %c0_0] : memref<8x256xf32, #tpu.memory_space<vmem>>, vector<8x256xf32>
    %1 = vector.extract_strided_slice %0 {offsets = [0, 64], sizes = [8, 32], strides = [1, 1]} : vector<8x256xf32> to vector<8x32xf32>
    %2 = vector.extract_strided_slice %0 {offsets = [0, 96], sizes = [8, 1], strides = [1, 1]} : vector<8x256xf32> to vector<8x1xf32>
    %3 = vector.extract_strided_slice %0 {offsets = [0, 128], sizes = [8, 32], strides = [1, 1]} : vector<8x256xf32> to vector<8x32xf32>
    %4 = vector.extract_strided_slice %0 {offsets = [0, 192], sizes = [8, 32], strides = [1, 1]} : vector<8x256xf32> to vector<8x32xf32>
    %5 = vector.extract_strided_slice %0 {offsets = [0, 224], sizes = [8, 32], strides = [1, 1]} : vector<8x256xf32> to vector<8x32xf32>
    %6 = vector.extract_strided_slice %0 {offsets = [0, 0], sizes = [8, 128], strides = [1, 1]} : vector<8x256xf32> to vector<8x128xf32>
    %7 = arith.truncf %6 : vector<8x128xf32> to vector<8x128xbf16>
    %c0_1 = arith.constant 0 : index
    %c0_2 = arith.constant 0 : index
    %8 = vector.load %arg4[%c0_1, %c0_2] : memref<128x128xbf16, #tpu.memory_space<vmem>>, vector<128x128xbf16>
    %cst = arith.constant dense<0.000000e+00> : vector<8x128xf32>
    %9 = tpu.matmul %7, %8, %cst {dimension_numbers = #tpu.dot_dimension_numbers<[1], [0], [0], [1], [0, 0, 1, 1], [], []>} : vector<8x128xbf16>, vector<128x128xbf16>, vector<8x128xf32> -> vector<8x128xf32>
    %c0_3 = arith.constant 0 : index
    %c0_4 = arith.constant 0 : index
    %10 = vector.load %arg5[%c0_3, %c0_4] : memref<1x128xf32, #tpu.memory_space<vmem>>, vector<1x128xf32>
    %11 = vector.broadcast %10 : vector<1x128xf32> to vector<8x128xf32>
    %12 = arith.addf %9, %11 : vector<8x128xf32>
    %13 = vector.extract_strided_slice %12 {offsets = [0, 0], sizes = [8, 32], strides = [1, 1]} : vector<8x128xf32> to vector<8x32xf32>
    %14 = arith.negf %13 : vector<8x32xf32>
    %15 = math.exp %14 : vector<8x32xf32>
    %cst_5 = arith.constant 1.000000e+00 : f32
    %16 = vector.broadcast %cst_5 : f32 to vector<8x32xf32>
    %17 = arith.addf %16, %15 : vector<8x32xf32>
    %18 = arith.divf %16, %17 : vector<8x32xf32>
    %19 = vector.extract_strided_slice %12 {offsets = [0, 32], sizes = [8, 32], strides = [1, 1]} : vector<8x128xf32> to vector<8x32xf32>
    %20 = arith.negf %19 : vector<8x32xf32>
    %21 = math.exp %20 : vector<8x32xf32>
    %cst_6 = arith.constant 1.000000e+00 : f32
    %22 = vector.broadcast %cst_6 : f32 to vector<8x32xf32>
    %23 = arith.addf %22, %21 : vector<8x32xf32>
    %24 = arith.divf %22, %23 : vector<8x32xf32>
    %25 = vector.extract_strided_slice %12 {offsets = [0, 64], sizes = [8, 32], strides = [1, 1]} : vector<8x128xf32> to vector<8x32xf32>
    %26 = math.tanh %25 : vector<8x32xf32>
    %27 = vector.extract_strided_slice %12 {offsets = [0, 96], sizes = [8, 32], strides = [1, 1]} : vector<8x128xf32> to vector<8x32xf32>
    %28 = arith.negf %27 : vector<8x32xf32>
    %29 = math.exp %28 : vector<8x32xf32>
    %cst_7 = arith.constant 1.000000e+00 : f32
    %30 = vector.broadcast %cst_7 : f32 to vector<8x32xf32>
    %31 = arith.addf %30, %29 : vector<8x32xf32>
    %32 = arith.divf %30, %31 : vector<8x32xf32>
    %33 = arith.mulf %24, %3 : vector<8x32xf32>
    %34 = arith.mulf %18, %26 : vector<8x32xf32>
    %35 = arith.addf %33, %34 : vector<8x32xf32>
    %36 = math.tanh %35 : vector<8x32xf32>
    %37 = arith.mulf %32, %36 : vector<8x32xf32>
    %cst_8 = arith.constant 0.000000e+00 : f32
    %38 = vector.broadcast %cst_8 : f32 to vector<8x1xf32>
    %39 = arith.cmpf ogt, %2, %38 : vector<8x1xf32>
    %40 = vector.shape_cast %39 : vector<8x1xi1> to vector<8x1xi1>
    %41 = vector.broadcast %40 : vector<8x1xi1> to vector<8x32xi1>
    %42 = arith.select %41, %1, %37 : vector<8x32xi1>, vector<8x32xf32>
    %43 = vector.shape_cast %39 : vector<8x1xi1> to vector<8x1xi1>
    %44 = vector.broadcast %43 : vector<8x1xi1> to vector<8x32xi1>
    %45 = arith.select %44, %3, %35 : vector<8x32xi1>, vector<8x32xf32>
    %c0_9 = arith.constant 0 : index
    %c0_10 = arith.constant 0 : index
    %46 = vector.load %arg14[%c0_9, %c0_10] : memref<8x128xf32, #tpu.memory_space<vmem>>, vector<8x32xf32>
    tpu.vector_store %arg14[%c0_9, %c0_10], %42 {strides = array<i32>} : memref<8x128xf32, #tpu.memory_space<vmem>>, vector<8x32xf32>,
    %c0_11 = arith.constant 0 : index
    %c32 = arith.constant 32 : index
    %47 = vector.load %arg14[%c0_11, %c32] : memref<8x128xf32, #tpu.memory_space<vmem>>, vector<8x32xf32>
    tpu.vector_store %arg14[%c0_11, %c32], %45 {strides = array<i32>} : memref<8x128xf32, #tpu.memory_space<vmem>>, vector<8x32xf32>,
    %48 = vector.extract_strided_slice %0 {offsets = [0, 128], sizes = [8, 128], strides = [1, 1]} : vector<8x256xf32> to vector<8x128xf32>
    %49 = arith.truncf %48 : vector<8x128xf32> to vector<8x128xbf16>
    %c0_12 = arith.constant 0 : index
    %c0_13 = arith.constant 0 : index
    %50 = vector.load %arg6[%c0_12, %c0_13] : memref<128x64xbf16, #tpu.memory_space<vmem>>, vector<128x64xbf16>
    %cst_14 = arith.constant dense<0.000000e+00> : vector<8x64xf32>
    %51 = tpu.matmul %49, %50, %cst_14 {dimension_numbers = #tpu.dot_dimension_numbers<[1], [0], [0], [1], [0, 0, 1, 1], [], []>} : vector<8x128xbf16>, vector<128x64xbf16>, vector<8x64xf32> -> vector<8x64xf32>
    %52 = arith.truncf %42 : vector<8x32xf32> to vector<8x32xbf16>
    %c0_15 = arith.constant 0 : index
    %c0_16 = arith.constant 0 : index
    %53 = vector.load %arg7[%c0_15, %c0_16] : memref<32x64xbf16, #tpu.memory_space<vmem>>, vector<32x64xbf16>
    %cst_17 = arith.constant dense<0.000000e+00> : vector<8x64xf32>
    %54 = tpu.matmul %52, %53, %cst_17 {dimension_numbers = #tpu.dot_dimension_numbers<[1], [0], [0], [1], [0, 0, 1, 1], [], []>} : vector<8x32xbf16>, vector<32x64xbf16>, vector<8x64xf32> -> vector<8x64xf32>
    %55 = arith.addf %51, %54 : vector<8x64xf32>
    %c0_18 = arith.constant 0 : index
    %c0_19 = arith.constant 0 : index
    %56 = vector.load %arg8[%c0_18, %c0_19] : memref<1x64xf32, #tpu.memory_space<vmem>>, vector<1x64xf32>
    %57 = vector.broadcast %56 : vector<1x64xf32> to vector<8x64xf32>
    %58 = arith.addf %55, %57 : vector<8x64xf32>
    %cst_20 = arith.constant 0.000000e+00 : f32
    %59 = vector.broadcast %cst_20 : f32 to vector<8x64xf32>
    %60 = arith.maximumf %58, %59 : vector<8x64xf32>
    %61 = arith.truncf %60 : vector<8x64xf32> to vector<8x64xbf16>
    %c0_21 = arith.constant 0 : index
    %c0_22 = arith.constant 0 : index
    %62 = vector.load %arg9[%c0_21, %c0_22] : memref<64x64xbf16, #tpu.memory_space<vmem>>, vector<64x64xbf16>
    %cst_23 = arith.constant dense<0.000000e+00> : vector<8x64xf32>
    %63 = tpu.matmul %61, %62, %cst_23 {dimension_numbers = #tpu.dot_dimension_numbers<[1], [0], [0], [1], [0, 0, 1, 1], [], []>} : vector<8x64xbf16>, vector<64x64xbf16>, vector<8x64xf32> -> vector<8x64xf32>
    %c0_24 = arith.constant 0 : index
    %c0_25 = arith.constant 0 : index
    %64 = vector.load %arg10[%c0_24, %c0_25] : memref<1x64xf32, #tpu.memory_space<vmem>>, vector<1x64xf32>
    %65 = vector.broadcast %64 : vector<1x64xf32> to vector<8x64xf32>
    %66 = arith.addf %63, %65 : vector<8x64xf32>
    %67 = vector.extract_strided_slice %66 {offsets = [0, 0], sizes = [8, 32], strides = [1, 1]} : vector<8x64xf32> to vector<8x32xf32>
    %68 = vector.extract_strided_slice %66 {offsets = [0, 32], sizes = [8, 32], strides = [1, 1]} : vector<8x64xf32> to vector<8x32xf32>
    %c0_26 = arith.constant 0 : index
    %c0_27 = arith.constant 0 : index
    %c0_28 = arith.constant 0 : index
    %69 = vector.load %arg2[%c0_26, %c0_27, %c0_28] : memref<8x64x128xbf16, #tpu.memory_space<vmem>>, vector<8x32x128xbf16>
    %c0_29 = arith.constant 0 : index
    %c32_30 = arith.constant 32 : index
    %c0_31 = arith.constant 0 : index
    %70 = vector.load %arg2[%c0_29, %c32_30, %c0_31] : memref<8x64x128xbf16, #tpu.memory_space<vmem>>, vector<8x32x128xbf16>
    %71 = vector.shape_cast %5 : vector<8x32xf32> to vector<8x1x32xf32>
    %72 = vector.shape_cast %68 : vector<8x32xf32> to vector<8x1x32xf32>
    %73 = tpu.concatenate %71, %72 in 1 : vector<8x1x32xf32>, vector<8x1x32xf32> -> vector<8x2x32xf32>
    %74 = arith.truncf %73 : vector<8x2x32xf32> to vector<8x2x32xbf16>
    %75 = arith.subf %4, %42 : vector<8x32xf32>
    %76 = vector.shape_cast %75 : vector<8x32xf32> to vector<8x1x32xf32>
    %77 = vector.shape_cast %67 : vector<8x32xf32> to vector<8x1x32xf32>
    %78 = tpu.concatenate %76, %77 in 1 : vector<8x1x32xf32>, vector<8x1x32xf32> -> vector<8x2x32xf32>
    %79 = arith.truncf %78 : vector<8x2x32xf32> to vector<8x2x32xbf16>
    "tpu.trace_start"() <{level = 10 : i32, message = "bkd,bdn->bkn"}> : () -> ()
    %cst_32 = arith.constant dense<0.000000e+00> : vector<8x2x128xf32>
    %80 = tpu.matmul %74, %69, %cst_32 {dimension_numbers = #tpu.dot_dimension_numbers<[2], [1], [1], [2], [0, 0, 0, 1, 1, 2], [0], [0]>} : vector<8x2x32xbf16>, vector<8x32x128xbf16>, vector<8x2x128xf32> -> vector<8x2x128xf32>
    %cst_33 = arith.constant dense<0.000000e+00> : vector<8x2x128xf32>
    %81 = tpu.matmul %79, %70, %cst_33 {dimension_numbers = #tpu.dot_dimension_numbers<[2], [1], [1], [2], [0, 0, 0, 1, 1, 2], [0], [0]>} : vector<8x2x32xbf16>, vector<8x32x128xbf16>, vector<8x2x128xf32> -> vector<8x2x128xf32>
    "tpu.trace_stop"() : () -> ()
    %82 = vector.extract_strided_slice %80 {offsets = [0, 0, 0], sizes = [8, 1, 128], strides = [1, 1, 1]} : vector<8x2x128xf32> to vector<8x1x128xf32>
    %83 = vector.shape_cast %82 : vector<8x1x128xf32> to vector<8x128xf32>
    %84 = vector.extract_strided_slice %80 {offsets = [0, 1, 0], sizes = [8, 1, 128], strides = [1, 1, 1]} : vector<8x2x128xf32> to vector<8x1x128xf32>
    %85 = vector.shape_cast %84 : vector<8x1x128xf32> to vector<8x128xf32>
    %86 = vector.extract_strided_slice %81 {offsets = [0, 0, 0], sizes = [8, 1, 128], strides = [1, 1, 1]} : vector<8x2x128xf32> to vector<8x1x128xf32>
    %87 = vector.shape_cast %86 : vector<8x1x128xf32> to vector<8x128xf32>
    %88 = arith.negf %87 : vector<8x128xf32>
    %89 = math.exp %88 : vector<8x128xf32>
    %cst_34 = arith.constant 1.000000e+00 : f32
    %90 = vector.broadcast %cst_34 : f32 to vector<8x128xf32>
    %91 = arith.addf %90, %89 : vector<8x128xf32>
    %92 = arith.divf %90, %91 : vector<8x128xf32>
    %93 = vector.extract_strided_slice %81 {offsets = [0, 1, 0], sizes = [8, 1, 128], strides = [1, 1, 1]} : vector<8x2x128xf32> to vector<8x1x128xf32>
    %94 = vector.shape_cast %93 : vector<8x1x128xf32> to vector<8x128xf32>
    %95 = arith.mulf %92, %94 : vector<8x128xf32>
    %cst_35 = arith.constant 1.000000e+00 : f32
    %96 = vector.broadcast %cst_35 : f32 to vector<8x128xf32>
    %97 = arith.subf %96, %92 : vector<8x128xf32>
    %98 = arith.mulf %97, %85 : vector<8x128xf32>
    %99 = arith.addf %95, %98 : vector<8x128xf32>
    %c0_36 = arith.constant 0 : index
    %c0_37 = arith.constant 0 : index
    %100 = vector.load %arg3[%c0_36, %c0_37] : memref<8x128xf32, #tpu.memory_space<vmem>>, vector<8x128xf32>
    %101 = vector.extract_strided_slice %0 {offsets = [0, 160], sizes = [8, 64], strides = [1, 1]} : vector<8x256xf32> to vector<8x64xf32>
    %c0_38 = arith.constant 0 : index
    %c0_39 = arith.constant 0 : index
    %102 = vector.load %arg11[%c0_38, %c0_39] : memref<1x64xf32, #tpu.memory_space<vmem>>, vector<1x64xf32>
    %103 = vector.broadcast %102 : vector<1x64xf32> to vector<8x64xf32>
    %104 = arith.mulf %101, %103 : vector<8x64xf32>
    %cst_40 = arith.constant dense<0.000000e+00> : vector<8xf32>
    %105 = vector.multi_reduction <add>, %104, %cst_40 [1] : vector<8x64xf32> to vector<8xf32>
    %106 = vector.shape_cast %105 : vector<8xf32> to vector<8x1xf32>
    %c0_41 = arith.constant 0 : index
    %c0_42 = arith.constant 0 : index
    %107 = vector.load %arg12[%c0_41, %c0_42] : memref<1x1xf32, #tpu.memory_space<vmem>>, vector<1x1xf32>
    %108 = vector.broadcast %107 : vector<1x1xf32> to vector<8x1xf32>
    %109 = arith.addf %106, %108 : vector<8x1xf32>
    %110 = arith.negf %109 : vector<8x1xf32>
    %111 = math.exp %110 : vector<8x1xf32>
    %cst_43 = arith.constant 1.000000e+00 : f32
    %112 = vector.broadcast %cst_43 : f32 to vector<8x1xf32>
    %113 = arith.addf %112, %111 : vector<8x1xf32>
    %114 = arith.divf %112, %113 : vector<8x1xf32>
    %cst_44 = arith.constant 0.000000e+00 : f32
    %115 = vector.broadcast %cst_44 : f32 to vector<8x128xf32>
    %116 = arith.maximumf %100, %115 : vector<8x128xf32>
    %117 = arith.mulf %116, %83 : vector<8x128xf32>
    %118 = vector.broadcast %114 : vector<8x1xf32> to vector<8x128xf32>
    %119 = arith.mulf %118, %117 : vector<8x128xf32>
    %120 = arith.addf %99, %119 : vector<8x128xf32>
    %cst_45 = arith.constant 0.000000e+00 : f32
    %121 = vector.broadcast %cst_45 : f32 to vector<8x128xf32>
    %122 = arith.cmpf olt, %100, %121 : vector<8x128xf32>
    %cst_46 = arith.constant -1.000000e+10 : f32
    %123 = vector.broadcast %cst_46 : f32 to vector<8x128xf32>
    %124 = arith.select %122, %123, %120 : vector<8x128xi1>, vector<8x128xf32>
    %cst_47 = arith.constant dense<0xFF800000> : vector<8xf32>
    %125 = vector.multi_reduction <maximumf>, %124, %cst_47 [1] : vector<8x128xf32> to vector<8xf32>
    %126 = vector.shape_cast %125 : vector<8xf32> to vector<8x1xf32>
    %127 = vector.broadcast %126 : vector<8x1xf32> to vector<8x128xf32>
    %128 = arith.subf %124, %127 : vector<8x128xf32>
    %129 = math.exp %128 : vector<8x128xf32>
    %cst_48 = arith.constant dense<0.000000e+00> : vector<8xf32>
    %130 = vector.multi_reduction <add>, %129, %cst_48 [1] : vector<8x128xf32> to vector<8xf32>
    %131 = vector.shape_cast %130 : vector<8xf32> to vector<8x1xf32>
    %132 = math.log %131 : vector<8x1xf32>
    %133 = vector.broadcast %132 : vector<8x1xf32> to vector<8x128xf32>
    %134 = arith.subf %128, %133 : vector<8x128xf32>
    %c0_49 = arith.constant 0 : index
    %c0_50 = arith.constant 0 : index
    %135 = vector.load %arg13[%c0_49, %c0_50] : memref<8x128xf32, #tpu.memory_space<vmem>>, vector<8x128xf32>
    tpu.vector_store %arg13[%c0_49, %c0_50], %134 {strides = array<i32>} : memref<8x128xf32, #tpu.memory_space<vmem>>, vector<8x128xf32>,
    return
  }
  func.func @transform_0(%arg0: i32) -> (i32, i32) {
    %c0_i32 = arith.constant 0 : i32
    %c0_i32_0 = arith.constant 0 : i32
    return %arg0, %c0_i32 : i32, i32
  }
  func.func @transform_1(%arg0: i32) -> (i32, i32, i32) {
    %c0_i32 = arith.constant 0 : i32
    %c0_i32_0 = arith.constant 0 : i32
    %c0_i32_1 = arith.constant 0 : i32
    return %arg0, %c0_i32, %c0_i32_0 : i32, i32, i32
  }
  func.func @transform_2(%arg0: i32) -> (i32, i32) {
    %c0_i32 = arith.constant 0 : i32
    %c0_i32_0 = arith.constant 0 : i32
    return %arg0, %c0_i32 : i32, i32
  }
  func.func @transform_3(%arg0: i32) -> (i32, i32) {
    %c0_i32 = arith.constant 0 : i32
    %c0_i32_0 = arith.constant 0 : i32
    %c0_i32_1 = arith.constant 0 : i32
    return %c0_i32, %c0_i32_0 : i32, i32
  }
  func.func @transform_4(%arg0: i32) -> (i32, i32) {
    %c0_i32 = arith.constant 0 : i32
    %c0_i32_0 = arith.constant 0 : i32
    %c0_i32_1 = arith.constant 0 : i32
    return %c0_i32, %c0_i32_0 : i32, i32
  }
  func.func @transform_5(%arg0: i32) -> (i32, i32) {
    %c0_i32 = arith.constant 0 : i32
    %c0_i32_0 = arith.constant 0 : i32
    %c0_i32_1 = arith.constant 0 : i32
    return %c0_i32, %c0_i32_0 : i32, i32
  }
  func.func @transform_6(%arg0: i32) -> (i32, i32) {
    %c0_i32 = arith.constant 0 : i32
    %c0_i32_0 = arith.constant 0 : i32
    %c0_i32_1 = arith.constant 0 : i32
    return %c0_i32, %c0_i32_0 : i32, i32
  }
  func.func @transform_7(%arg0: i32) -> (i32, i32) {
    %c0_i32 = arith.constant 0 : i32
    %c0_i32_0 = arith.constant 0 : i32
    %c0_i32_1 = arith.constant 0 : i32
    return %c0_i32, %c0_i32_0 : i32, i32
  }
  func.func @transform_8(%arg0: i32) -> (i32, i32) {
    %c0_i32 = arith.constant 0 : i32
    %c0_i32_0 = arith.constant 0 : i32
    %c0_i32_1 = arith.constant 0 : i32
    return %c0_i32, %c0_i32_0 : i32, i32
  }
  func.func @transform_9(%arg0: i32) -> (i32, i32) {
    %c0_i32 = arith.constant 0 : i32
    %c0_i32_0 = arith.constant 0 : i32
    %c0_i32_1 = arith.constant 0 : i32
    return %c0_i32, %c0_i32_0 : i32, i32
  }
  func.func @transform_10(%arg0: i32) -> (i32, i32) {
    %c0_i32 = arith.constant 0 : i32
    %c0_i32_0 = arith.constant 0 : i32
    %c0_i32_1 = arith.constant 0 : i32
    return %c0_i32, %c0_i32_0 : i32, i32
  }
  func.func @transform_11(%arg0: i32) -> (i32, i32) {
    %c0_i32 = arith.constant 0 : i32
    %c0_i32_0 = arith.constant 0 : i32
    %c0_i32_1 = arith.constant 0 : i32
    return %c0_i32, %c0_i32_0 : i32, i32
  }
  func.func @transform_12(%arg0: i32) -> (i32, i32) {
    %c0_i32 = arith.constant 0 : i32
    %c0_i32_0 = arith.constant 0 : i32
    return %arg0, %c0_i32 : i32, i32
  }
  func.func @transform_13(%arg0: i32) -> (i32, i32) {
    %c0_i32 = arith.constant 0 : i32
    %c0_i32_0 = arith.constant 0 : i32
    return %arg0, %c0_i32 : i32, i32
  }
}

</mosaic_0001>

<llo_original>
// kernel: tpu_custom_call.1
$region0: #{tpu_custom_call.1}
  #allocation0 [shape = 'u32[]', space=smem, size = 0x4, offset = 0x4, fixed_abs, tag = 'smem constant byte address 0x4 - core index']
  #allocation1 [shape = 'u32[144,128]{1,0:T(1,128)}', space=vmem, size = 0x12000, scoped, tag = 'internal scratch']
  #allocation2 [shape = 'f32[1,1]{1,0:T(1,128)S(1)}', space=vmem, size = 0x200, scoped, tag = 'scoped memory for tpu_custom_call.1']
  %s0 = inlined_call_operand.hbm [shape: f32[8,256], index: 0, kind: input, shape index: {}]
  %s1 = inlined_call_operand.hbm [shape: bf16[8,64,128], index: 1, kind: input, shape index: {}]
  %s2 = inlined_call_operand.hbm [shape: f32[8,128], index: 2, kind: input, shape index: {}]
  %s3 = inlined_call_operand.vmem [shape: bf16[128,128], index: 3, kind: input, shape index: {}]
  %s4 = inlined_call_operand.vmem [shape: f32[1,128], index: 4, kind: input, shape index: {}]
  %s5 = inlined_call_operand.vmem [shape: bf16[128,64], index: 5, kind: input, shape index: {}]
  %s6 = inlined_call_operand.vmem [shape: bf16[32,64], index: 6, kind: input, shape index: {}]
  %s7 = inlined_call_operand.vmem [shape: f32[1,64], index: 7, kind: input, shape index: {}]
  %s8 = inlined_call_operand.vmem [shape: bf16[64,64], index: 8, kind: input, shape index: {}]
  %s9 = inlined_call_operand.vmem [shape: f32[1,64], index: 9, kind: input, shape index: {}]
  %s10 = inlined_call_operand.vmem [shape: f32[1,64], index: 10, kind: input, shape index: {}]
  %s11 = inlined_call_operand.<no memory space> [shape: f32[1,1], index: 11, kind: input, shape index: {}]
  %s12 = inlined_call_operand.hbm [shape: f32[8,128], index: 12, kind: output, shape index: {0}]
  %s13 = inlined_call_operand.hbm [shape: f32[8,128], index: 13, kind: output, shape index: {1}]
  %14 = xla_tuple %s12, %s13
  %s15 = sld [smem:[#allocation0]]
  $region78: #{tpu_custom_call.1} parent=0
    _
  %s17 = ssub.s32 1, %s15
  %s18 = scalar_select 0, %s17, %s15
  %v19 = vstv %s11
  %20 = vst [vmem:[#allocation2] sm:$0x1] %v19
  $region1: #{tpu_custom_call.1} parent=0
    #allocation3 [shape = 'u8[8192]{0}', space=vmem, size = 0x2000, scoped, tag = 'input window, operand 0, single buffered']
    #allocation4 [shape = 's32[1]{0}', space=sflag, size = 0x4, scoped, tag = 'scoped memory for tpu_custom_call.1']
    #allocation5 [shape = 's32[1]{0}', space=sflag, size = 0x4, scoped, tag = 'scoped memory for tpu_custom_call.1']
    #allocation6 [shape = 'u8[131072]{0}', space=vmem, size = 0x20000, scoped, tag = 'input window, operand 1, single buffered']
    #allocation7 [shape = 's32[1]{0}', space=sflag, size = 0x4, scoped, tag = 'scoped memory for tpu_custom_call.1']
    #allocation8 [shape = 'u8[4096]{0}', space=vmem, size = 0x1000, scoped, tag = 'input window, operand 2, single buffered']
    #allocation9 [shape = 'u8[4096]{0}', space=vmem, size = 0x1000, scoped, tag = 'output window, operand 0, single buffered']
    #allocation10 [shape = 'u8[4096]{0}', space=vmem, size = 0x1000, scoped, tag = 'output window, operand 1, single buffered']
    #allocation11 [shape = 's32[1]{0}', space=sflag, size = 0x4, scoped, tag = 'scoped memory for tpu_custom_call.1']
    %21 = vsyncpa [#allocation4], 0
    %22 = vsyncpa [#allocation7], 0
    %23 = vsyncpa [#allocation5], 0
    %24 = vsyncpa [#allocation11], 0
    // Predicated region
    $region2: #{tpu_custom_call.1} parent=1 // pred_check
      _
    $region3: #{tpu_custom_call.1} parent=1 // pred_check_branch
      %26 = sbr.rel (0) target = $region5
    $region4: #{tpu_custom_call.1} parent=1 // pred_region
      %s28 = ssub.s32 256, 256
      %29 = vsyncadd [#allocation4], %s28
      %s31 = sshll.u32 [#allocation3], 4
      %s32 = int_to_ptr.vmem [resolvable:$true] %s31
      %34 = dma.hbm_to_vmem [thread:$0]  %s0, 256, %s32, [#allocation4]
    $region5: #{tpu_custom_call.1} parent=1 // pred_fallthru
      _
    // Predicated region
    $region6: #{tpu_custom_call.1} parent=1 // pred_check
      _
    $region7: #{tpu_custom_call.1} parent=1 // pred_check_branch
      %36 = sbr.rel (0) target = $region9
    $region8: #{tpu_custom_call.1} parent=1 // pred_region
      %s38 = ssub.s32 4096, 4096
      %39 = vsyncadd [#allocation7], %s38
      %s40 = sshll.u32 [#allocation6], 4
      %s41 = int_to_ptr.vmem [resolvable:$true] %s40
      %46 = dma.hbm_to_vmem [thread:$0]  %s1, 4096, %s41, [#allocation7], 64, 64, 4
    $region9: #{tpu_custom_call.1} parent=1 // pred_fallthru
      _
    // Predicated region
    $region10: #{tpu_custom_call.1} parent=1 // pred_check
      _
    $region11: #{tpu_custom_call.1} parent=1 // pred_check_branch
      %48 = sbr.rel (0) target = $region13
    $region12: #{tpu_custom_call.1} parent=1 // pred_region
      %s50 = ssub.s32 128, 128
      %51 = vsyncadd [#allocation7], %s50
      %s53 = sshll.u32 [#allocation8], 4
      %s54 = int_to_ptr.vmem [resolvable:$true] %s53
      %56 = dma.hbm_to_vmem [thread:$0]  %s2, 128, %s54, [#allocation7]
    $region13: #{tpu_custom_call.1} parent=1 // pred_fallthru
      _
    // Predicated region
    $region14: #{tpu_custom_call.1} parent=1 // pred_check
      _
    $region15: #{tpu_custom_call.1} parent=1 // pred_check_branch
      %58 = sbr.rel (0) target = $region17
    $region16: #{tpu_custom_call.1} parent=1 // pred_region
      _
    $region17: #{tpu_custom_call.1} parent=1 // pred_fallthru
      _
    // Predicated region
    $region18: #{tpu_custom_call.1} parent=1 // pred_check
      _
    $region19: #{tpu_custom_call.1} parent=1 // pred_check_branch
      %60 = sbr.rel (0) target = $region21
    $region20: #{tpu_custom_call.1} parent=1 // pred_region
      _
    $region21: #{tpu_custom_call.1} parent=1 // pred_fallthru
      _
    // Predicated region
    $region22: #{tpu_custom_call.1} parent=1 // pred_check
      _
    $region23: #{tpu_custom_call.1} parent=1 // pred_check_branch
      %62 = sbr.rel (0) target = $region25
    $region24: #{tpu_custom_call.1} parent=1 // pred_region
      _
    $region25: #{tpu_custom_call.1} parent=1 // pred_fallthru
      _
    // Predicated region
    $region26: #{tpu_custom_call.1} parent=1 // pred_check
      _
    $region27: #{tpu_custom_call.1} parent=1 // pred_check_branch
      %64 = sbr.rel (0) target = $region29
    $region28: #{tpu_custom_call.1} parent=1 // pred_region
      _
    $region29: #{tpu_custom_call.1} parent=1 // pred_fallthru
      _
    // Predicated region
    $region30: #{tpu_custom_call.1} parent=1 // pred_check
      _
    $region31: #{tpu_custom_call.1} parent=1 // pred_check_branch
      %66 = sbr.rel (0) target = $region33
    $region32: #{tpu_custom_call.1} parent=1 // pred_region
      _
    $region33: #{tpu_custom_call.1} parent=1 // pred_fallthru
      _
    // Predicated region
    $region34: #{tpu_custom_call.1} parent=1 // pred_check
      _
    $region35: #{tpu_custom_call.1} parent=1 // pred_check_branch
      %68 = sbr.rel (0) target = $region37
    $region36: #{tpu_custom_call.1} parent=1 // pred_region
      _
    $region37: #{tpu_custom_call.1} parent=1 // pred_fallthru
      _
    // Predicated region
    $region38: #{tpu_custom_call.1} parent=1 // pred_check
      _
    $region39: #{tpu_custom_call.1} parent=1 // pred_check_branch
      %70 = sbr.rel (0) target = $region41
    $region40: #{tpu_custom_call.1} parent=1 // pred_region
      _
    $region41: #{tpu_custom_call.1} parent=1 // pred_fallthru
      _
    // Predicated region
    $region42: #{tpu_custom_call.1} parent=1 // pred_check
      _
    $region43: #{tpu_custom_call.1} parent=1 // pred_check_branch
      %72 = sbr.rel (0) target = $region45
    $region44: #{tpu_custom_call.1} parent=1 // pred_region
      _
    $region45: #{tpu_custom_call.1} parent=1 // pred_fallthru
      _
    // Predicated region
    $region46: #{tpu_custom_call.1} parent=1 // pred_check
      _
    $region47: #{tpu_custom_call.1} parent=1 // pred_check_branch
      %74 = sbr.rel (0) target = $region49
    $region48: #{tpu_custom_call.1} parent=1 // pred_region
      _
    $region49: #{tpu_custom_call.1} parent=1 // pred_fallthru
      _
    // Predicated region
    $region50: #{tpu_custom_call.1} parent=1 // pred_check
      _
    $region51: #{tpu_custom_call.1} parent=1 // pred_check_branch
      %76 = sbr.rel (0) target = $region53
    $region52: #{tpu_custom_call.1} parent=1 // pred_region
      %77 = dma.done [#allocation4], 256
    $region53: #{tpu_custom_call.1} parent=1 // pred_fallthru
      _
    // Predicated region
    $region54: #{tpu_custom_call.1} parent=1 // pred_check
      _
    $region55: #{tpu_custom_call.1} parent=1 // pred_check_branch
      %79 = sbr.rel (0) target = $region57
    $region56: #{tpu_custom_call.1} parent=1 // pred_region
      %80 = dma.done [#allocation7], 4096
    $region57: #{tpu_custom_call.1} parent=1 // pred_fallthru
      _
    // Predicated region
    $region58: #{tpu_custom_call.1} parent=1 // pred_check
      _
    $region59: #{tpu_custom_call.1} parent=1 // pred_check_branch
      %82 = sbr.rel (0) target = $region61
    $region60: #{tpu_custom_call.1} parent=1 // pred_region
      %83 = dma.done [#allocation7], 128
    $region61: #{tpu_custom_call.1} parent=1 // pred_fallthru
      _
    %v85 = vld [vmem:[#allocation3] sm:$0xff]
    %v86 = vld [vmem:[#allocation3 + $0x8] sm:$0xff]
    %v87 = vpack.c.bf16 %v85, %v85
    %v88 = vld [vmem:[%s3] sm:$0xf]
    %v89 = vld [vmem:[%s3 + $0x4] sm:$0xf]
    %v90 = vld [vmem:[%s3 + $0x8] sm:$0xf]
    %v91 = vld [vmem:[%s3 + $0xc] sm:$0xf]
    %v92 = vld [vmem:[%s3 + $0x10] sm:$0xf]
    %v93 = vld [vmem:[%s3 + $0x14] sm:$0xf]
    %v94 = vld [vmem:[%s3 + $0x18] sm:$0xf]
    %v95 = vld [vmem:[%s3 + $0x1c] sm:$0xf]
    %v96 = vld [vmem:[%s3 + $0x20] sm:$0xf]
    %v97 = vld [vmem:[%s3 + $0x24] sm:$0xf]
    %v98 = vld [vmem:[%s3 + $0x28] sm:$0xf]
    %v99 = vld [vmem:[%s3 + $0x2c] sm:$0xf]
    %v100 = vld [vmem:[%s3 + $0x30] sm:$0xf]
    %v101 = vld [vmem:[%s3 + $0x34] sm:$0xf]
    %v102 = vld [vmem:[%s3 + $0x38] sm:$0xf]
    %v103 = vld [vmem:[%s3 + $0x3c] sm:$0xf]
    %v104 = vld [vmem:[%s4] sm:$0x1]
    %v106 = vlaneseq
    %v107 = vshrl.u32 %v106, 7
    %v108 = vsub.s32 0, %v107
    %v109 = vrot.slane %v104, %v108
    %v127 = vunpack.c.l.b16 %v88
    %v128 = vunpack.c.l.b16 %v89
    %v129 = vunpack.c.l.b16 %v90
    %v130 = vunpack.c.l.b16 %v91
    %v131 = vunpack.c.l.b16 %v92
    %v132 = vunpack.c.l.b16 %v93
    %v133 = vunpack.c.l.b16 %v94
    %v134 = vunpack.c.l.b16 %v95
    %v135 = vunpack.c.l.b16 %v96
    %v136 = vunpack.c.l.b16 %v97
    %v137 = vunpack.c.l.b16 %v98
    %v138 = vunpack.c.l.b16 %v99
    %v139 = vunpack.c.l.b16 %v100
    %v140 = vunpack.c.l.b16 %v101
    %v141 = vunpack.c.l.b16 %v102
    %v142 = vunpack.c.l.b16 %v103
    %v143 = vpack.c.b16 %v128, %v127
    %v144 = vpack.c.b16 %v130, %v129
    %v145 = vpack.c.b16 %v132, %v131
    %v146 = vpack.c.b16 %v134, %v133
    %v147 = vpack.c.b16 %v136, %v135
    %v148 = vpack.c.b16 %v138, %v137
    %v149 = vpack.c.b16 %v140, %v139
    %v150 = vpack.c.b16 %v142, %v141
    %159 = vmatprep.subr.bf16.mxu0 0
    %160 = vmatpush1.bf16.msra.mxu0 %v143
    %161 = vmatprep.subr.bf16.mxu0 0
    %162 = vmatpush1.bf16.msra.mxu0 %v144
    %163 = vmatprep.subr.bf16.mxu0 0
    %164 = vmatpush1.bf16.msra.mxu0 %v145
    %165 = vmatprep.subr.bf16.mxu0 0
    %166 = vmatpush1.bf16.msra.mxu0 %v146
    %167 = vmatprep.subr.bf16.mxu0 0
    %168 = vmatpush1.bf16.msra.mxu0 %v147
    %169 = vmatprep.subr.bf16.mxu0 0
    %170 = vmatpush1.bf16.msra.mxu0 %v148
    %171 = vmatprep.subr.bf16.mxu0 0
    %172 = vmatpush1.bf16.msra.mxu0 %v149
    %173 = vmatprep.subr.bf16.mxu0 0
    %174 = vmatpush1.bf16.msra.mxu0 %v150
    %175 = vmatprep.subr.bf16.mxu0 0
    %176 = vmatpush1.bf16.msra.mxu0 0
    %177 = vmatprep.subr.bf16.mxu0 0
    %178 = vmatpush1.bf16.msra.mxu0 0
    %179 = vmatprep.subr.bf16.mxu0 0
    %180 = vmatpush1.bf16.msra.mxu0 0
    %181 = vmatprep.subr.bf16.mxu0 0
    %182 = vmatpush1.bf16.msra.mxu0 0
    %183 = vmatprep.subr.bf16.mxu0 0
    %184 = vmatpush1.bf16.msra.mxu0 0
    %185 = vmatprep.subr.bf16.mxu0 0
    %186 = vmatpush1.bf16.msra.mxu0 0
    %187 = vmatprep.subr.bf16.mxu0 0
    %188 = vmatpush1.bf16.msra.mxu0 0
    %189 = vmatprep.subr.bf16.mxu0 0
    %190 = vmatpush1.bf16.msra.mxu0 0
    %191 = vmatprep.mubr.bf16.mxu0 0
    %192 = vmatmul.mubr.bf16.gmra.mrb[0].mxu0 %v87
    %v193 = vpop.f32.mrb[0].mxu0
    %v194 = vadd.f32 %v109, %v193
    %v195 = vpop.f32.mrb[0].mxu0
    %v196 = vpop.f32.mrb[0].mxu0
    %v197 = vpop.f32.mrb[0].mxu0
    %198 = vdwg.mxu0
    %v199 = vxor.u32 %v194, 2147483648
    %v200 = vmul.f32 %v199, 1.442695
    %v201 = vpow.pop %v200
    %v202 = vadd.f32 %v201, 1.0
    %v203 = vrcp.pop %v202
    %v204 = vmul.f32 1.0, %v203
    %v205 = vtanh.pop %v194
    %207 = vrot.lane.b32.xlu0 %v86, 32
    %v208 = vpop.permute.xlu0 %207
    %v210 = vmul.f32 %v204, %v208
    %212 = vrot.lane.b32.xlu0 %v205, 64
    %v213 = vpop.permute.xlu0 %212
    %v215 = vmul.f32 %v204, %v213
    %217 = vrot.lane.b32.xlu0 %v215, 32
    %v218 = vpop.permute.xlu0 %217
    %v220 = vadd.f32 %v210, %v218
    %v221 = vtanh.pop %v220
    %223 = vrot.lane.b32.xlu0 %v221, 64
    %v224 = vpop.permute.xlu0 %223
    %v226 = vmul.f32 %v204, %v224
    %vm227 = vcmp.gt.f32.partialorder %v85, 0.0
    %v228 = vsel %vm227, 1, 0
    %229 = vset.pattern.permute.xlu0 96
    %230 = vperm.xlu0 %229, %v228
    %v231 = vpop.permute.xlu0 %230
    %vm232 = vcmp.eq.s32.totalorder %v231, 1
    %234 = vrot.lane.b32.xlu0 %v226, 96
    %v235 = vpop.permute.xlu0 %234
    %v237 = vsel %vm232, %v85, %v235
    %239 = vrot.lane.b32.xlu0 %v220, 96
    %v240 = vpop.permute.xlu0 %239
    %v242 = vsel %vm232, %v86, %v240
    %244 = vrot.lane.b32.xlu0 %v237, 64
    %v245 = vpop.permute.xlu0 %244
    %vm247 = vcmask 261120
    %248 = vst.msk [vmem:[#allocation10] sm:$0xff] %vm247, %v245
    %250 = vrot.lane.b32.xlu0 %v242, 32
    %v251 = vpop.permute.xlu0 %250
    %vm253 = vcmask 523520
    %254 = vst.msk [vmem:[#allocation10] sm:$0xff] %vm253, %v251
    %v255 = vpack.c.bf16 %v86, %v86
    %v256 = vld [vmem:[%s5] sm:$0xf]
    %v257 = vld [vmem:[%s5 + $0x4] sm:$0xf]
    %v258 = vld [vmem:[%s5 + $0x8] sm:$0xf]
    %v259 = vld [vmem:[%s5 + $0xc] sm:$0xf]
    %v260 = vld [vmem:[%s5 + $0x10] sm:$0xf]
    %v261 = vld [vmem:[%s5 + $0x14] sm:$0xf]
    %v262 = vld [vmem:[%s5 + $0x18] sm:$0xf]
    %v263 = vld [vmem:[%s5 + $0x1c] sm:$0xf]
    %v264 = vld [vmem:[%s5 + $0x20] sm:$0xf]
    %v265 = vld [vmem:[%s5 + $0x24] sm:$0xf]
    %v266 = vld [vmem:[%s5 + $0x28] sm:$0xf]
    %v267 = vld [vmem:[%s5 + $0x2c] sm:$0xf]
    %v268 = vld [vmem:[%s5 + $0x30] sm:$0xf]
    %v269 = vld [vmem:[%s5 + $0x34] sm:$0xf]
    %v270 = vld [vmem:[%s5 + $0x38] sm:$0xf]
    %v271 = vld [vmem:[%s5 + $0x3c] sm:$0xf]
    %v272 = vpack.c.bf16 %v237, %v237
    %v273 = vld [vmem:[%s6] sm:$0xf]
    %v274 = vld [vmem:[%s6 + $0x4] sm:$0xf]
    %v275 = vld [vmem:[%s6 + $0x8] sm:$0xf]
    %v276 = vld [vmem:[%s6 + $0xc] sm:$0xf]
    %278 = vrot.lane.b32.xlu0 %v272, 64
    %v279 = vpop.permute.xlu0 %278
    %v284 = vunpack.c.l.b16 %v273
    %v285 = vunpack.c.l.b16 %v274
    %v286 = vunpack.c.l.b16 %v275
    %v287 = vunpack.c.l.b16 %v276
    %v288 = vpack.c.b16 %v285, %v284
    %v289 = vpack.c.b16 %v287, %v286
    %v293 = vsel %vm247, %v279, 0
    %295 = vmatprep.subr.bf16.mxu0 0
    %296 = vmatpush1.bf16.msra.mxu0 %v288
    %297 = vmatprep.subr.bf16.mxu0 0
    %298 = vmatpush1.bf16.msra.mxu0 %v289
    %299 = vmatprep.subr.bf16.mxu0 0
    %300 = vmatpush1.bf16.msra.mxu0 0
    %301 = vmatprep.subr.bf16.mxu0 0
    %302 = vmatpush1.bf16.msra.mxu0 0
    %303 = vmatprep.subr.bf16.mxu0 0
    %304 = vmatpush1.bf16.msra.mxu0 0
    %305 = vmatprep.subr.bf16.mxu0 0
    %306 = vmatpush1.bf16.msra.mxu0 0
    %307 = vmatprep.subr.bf16.mxu0 0
    %308 = vmatpush1.bf16.msra.mxu0 0
    %309 = vmatprep.subr.bf16.mxu0 0
    %310 = vmatpush1.bf16.msra.mxu0 0
    %311 = vmatprep.subr.bf16.mxu0 0
    %312 = vmatpush1.bf16.msra.mxu0 0
    %313 = vmatprep.subr.bf16.mxu0 0
    %314 = vmatpush1.bf16.msra.mxu0 0
    %315 = vmatprep.subr.bf16.mxu0 0
    %316 = vmatpush1.bf16.msra.mxu0 0
    %317 = vmatprep.subr.bf16.mxu0 0
    %318 = vmatpush1.bf16.msra.mxu0 0
    %319 = vmatprep.subr.bf16.mxu0 0
    %320 = vmatpush1.bf16.msra.mxu0 0
    %321 = vmatprep.subr.bf16.mxu0 0
    %322 = vmatpush1.bf16.msra.mxu0 0
    %323 = vmatprep.subr.bf16.mxu0 0
    %324 = vmatpush1.bf16.msra.mxu0 0
    %325 = vmatprep.subr.bf16.mxu0 0
    %326 = vmatpush1.bf16.msra.mxu0 0
    %327 = vmatprep.mubr.bf16.mxu0 0
    %328 = vmatmul.mubr.bf16.gmra.mrb[0].mxu0 %v293
    %v329 = vpop.f32.mrb[0].mxu0
    %v330 = vadd.f32 0.0, %v329
    %v331 = vpop.f32.mrb[0].mxu0
    %v332 = vpop.f32.mrb[0].mxu0
    %v333 = vpop.f32.mrb[0].mxu0
    %334 = vdwg.mxu0
    %v351 = vunpack.c.l.b16 %v256
    %v352 = vunpack.c.l.b16 %v257
    %v353 = vunpack.c.l.b16 %v258
    %v354 = vunpack.c.l.b16 %v259
    %v355 = vunpack.c.l.b16 %v260
    %v356 = vunpack.c.l.b16 %v261
    %v357 = vunpack.c.l.b16 %v262
    %v358 = vunpack.c.l.b16 %v263
    %v359 = vunpack.c.l.b16 %v264
    %v360 = vunpack.c.l.b16 %v265
    %v361 = vunpack.c.l.b16 %v266
    %v362 = vunpack.c.l.b16 %v267
    %v363 = vunpack.c.l.b16 %v268
    %v364 = vunpack.c.l.b16 %v269
    %v365 = vunpack.c.l.b16 %v270
    %v366 = vunpack.c.l.b16 %v271
    %v367 = vpack.c.b16 %v352, %v351
    %v368 = vpack.c.b16 %v354, %v353
    %v369 = vpack.c.b16 %v356, %v355
    %v370 = vpack.c.b16 %v358, %v357
    %v371 = vpack.c.b16 %v360, %v359
    %v372 = vpack.c.b16 %v362, %v361
    %v373 = vpack.c.b16 %v364, %v363
    %v374 = vpack.c.b16 %v366, %v365
    %383 = vmatprep.subr.bf16.mxu0 0
    %384 = vmatpush1.bf16.msra.mxu0 %v367
    %385 = vmatprep.subr.bf16.mxu0 0
    %386 = vmatpush1.bf16.msra.mxu0 %v368
    %387 = vmatprep.subr.bf16.mxu0 0
    %388 = vmatpush1.bf16.msra.mxu0 %v369
    %389 = vmatprep.subr.bf16.mxu0 0
    %390 = vmatpush1.bf16.msra.mxu0 %v370
    %391 = vmatprep.subr.bf16.mxu0 0
    %392 = vmatpush1.bf16.msra.mxu0 %v371
    %393 = vmatprep.subr.bf16.mxu0 0
    %394 = vmatpush1.bf16.msra.mxu0 %v372
    %395 = vmatprep.subr.bf16.mxu0 0
    %396 = vmatpush1.bf16.msra.mxu0 %v373
    %397 = vmatprep.subr.bf16.mxu0 0
    %398 = vmatpush1.bf16.msra.mxu0 %v374
    %399 = vmatprep.subr.bf16.mxu0 0
    %400 = vmatpush1.bf16.msra.mxu0 0
    %401 = vmatprep.subr.bf16.mxu0 0
    %402 = vmatpush1.bf16.msra.mxu0 0
    %403 = vmatprep.subr.bf16.mxu0 0
    %404 = vmatpush1.bf16.msra.mxu0 0
    %405 = vmatprep.subr.bf16.mxu0 0
    %406 = vmatpush1.bf16.msra.mxu0 0
    %407 = vmatprep.subr.bf16.mxu0 0
    %408 = vmatpush1.bf16.msra.mxu0 0
    %409 = vmatprep.subr.bf16.mxu0 0
    %410 = vmatpush1.bf16.msra.mxu0 0
    %411 = vmatprep.subr.bf16.mxu0 0
    %412 = vmatpush1.bf16.msra.mxu0 0
    %413 = vmatprep.subr.bf16.mxu0 0
    %414 = vmatpush1.bf16.msra.mxu0 0
    %415 = vmatprep.mubr.bf16.mxu0 0
    %416 = vmatmul.mubr.bf16.gmra.mrb[0].mxu0 %v255
    %v417 = vpop.f32.mrb[0].mxu0
    %v418 = vadd.f32 %v330, %v417
    %v419 = vpop.f32.mrb[0].mxu0
    %v420 = vpop.f32.mrb[0].mxu0
    %v421 = vpop.f32.mrb[0].mxu0
    %422 = vdwg.mxu0
    %v423 = vld [vmem:[%s7] sm:$0x1]
    %v425 = vlaneseq
    %v426 = vshrl.u32 %v425, 7
    %v427 = vsub.s32 0, %v426
    %v428 = vrot.slane %v423, %v427
    %v430 = vadd.f32 %v418, %v428
    %v431 = vmax.f32 %v430, 0.0
    %v432 = vpack.c.bf16 %v431, %v431
    %v433 = vld [vmem:[%s8] sm:$0xf]
    %v434 = vld [vmem:[%s8 + $0x4] sm:$0xf]
    %v435 = vld [vmem:[%s8 + $0x8] sm:$0xf]
    %v436 = vld [vmem:[%s8 + $0xc] sm:$0xf]
    %v437 = vld [vmem:[%s8 + $0x10] sm:$0xf]
    %v438 = vld [vmem:[%s8 + $0x14] sm:$0xf]
    %v439 = vld [vmem:[%s8 + $0x18] sm:$0xf]
    %v440 = vld [vmem:[%s8 + $0x1c] sm:$0xf]
    %v441 = vld [vmem:[%s9] sm:$0x1]
    %v443 = vlaneseq
    %v444 = vshrl.u32 %v443, 7
    %v445 = vsub.s32 0, %v444
    %v446 = vrot.slane %v441, %v445
    %v456 = vunpack.c.l.b16 %v433
    %v457 = vunpack.c.l.b16 %v434
    %v458 = vunpack.c.l.b16 %v435
    %v459 = vunpack.c.l.b16 %v436
    %v460 = vunpack.c.l.b16 %v437
    %v461 = vunpack.c.l.b16 %v438
    %v462 = vunpack.c.l.b16 %v439
    %v463 = vunpack.c.l.b16 %v440
    %v464 = vpack.c.b16 %v457, %v456
    %v465 = vpack.c.b16 %v459, %v458
    %v466 = vpack.c.b16 %v461, %v460
    %v467 = vpack.c.b16 %v463, %v462
    %vm472 = vcmask 523264
    %v474 = vsel %vm472, %v432, 0
    %476 = vmatprep.subr.bf16.mxu0 0
    %477 = vmatpush1.bf16.msra.mxu0 %v464
    %478 = vmatprep.subr.bf16.mxu0 0
    %479 = vmatpush1.bf16.msra.mxu0 %v465
    %480 = vmatprep.subr.bf16.mxu0 0
    %481 = vmatpush1.bf16.msra.mxu0 %v466
    %482 = vmatprep.subr.bf16.mxu0 0
    %483 = vmatpush1.bf16.msra.mxu0 %v467
    %484 = vmatprep.subr.bf16.mxu0 0
    %485 = vmatpush1.bf16.msra.mxu0 0
    %486 = vmatprep.subr.bf16.mxu0 0
    %487 = vmatpush1.bf16.msra.mxu0 0
    %488 = vmatprep.subr.bf16.mxu0 0
    %489 = vmatpush1.bf16.msra.mxu0 0
    %490 = vmatprep.subr.bf16.mxu0 0
    %491 = vmatpush1.bf16.msra.mxu0 0
    %492 = vmatprep.subr.bf16.mxu0 0
    %493 = vmatpush1.bf16.msra.mxu0 0
    %494 = vmatprep.subr.bf16.mxu0 0
    %495 = vmatpush1.bf16.msra.mxu0 0
    %496 = vmatprep.subr.bf16.mxu0 0
    %497 = vmatpush1.bf16.msra.mxu0 0
    %498 = vmatprep.subr.bf16.mxu0 0
    %499 = vmatpush1.bf16.msra.mxu0 0
    %500 = vmatprep.subr.bf16.mxu0 0
    %501 = vmatpush1.bf16.msra.mxu0 0
    %502 = vmatprep.subr.bf16.mxu0 0
    %503 = vmatpush1.bf16.msra.mxu0 0
    %504 = vmatprep.subr.bf16.mxu0 0
    %505 = vmatpush1.bf16.msra.mxu0 0
    %506 = vmatprep.subr.bf16.mxu0 0
    %507 = vmatpush1.bf16.msra.mxu0 0
    %508 = vmatprep.mubr.bf16.mxu0 0
    %509 = vmatmul.mubr.bf16.gmra.mrb[0].mxu0 %v474
    %v510 = vpop.f32.mrb[0].mxu0
    %v511 = vadd.f32 %v446, %v510
    %v512 = vpop.f32.mrb[0].mxu0
    %v513 = vpop.f32.mrb[0].mxu0
    %v514 = vpop.f32.mrb[0].mxu0
    %515 = vdwg.mxu0
    %v516 = vld [vmem:[#allocation6] sm:$0xf]
    %v517 = vld [vmem:[#allocation6 + $0x4] sm:$0xf]
    %v518 = vld [vmem:[#allocation6 + $0x8] sm:$0xf]
    %v519 = vld [vmem:[#allocation6 + $0xc] sm:$0xf]
    %v520 = vld [vmem:[#allocation6 + $0x20] sm:$0xf]
    %v521 = vld [vmem:[#allocation6 + $0x24] sm:$0xf]
    %v522 = vld [vmem:[#allocation6 + $0x28] sm:$0xf]
    %v523 = vld [vmem:[#allocation6 + $0x2c] sm:$0xf]
    %v524 = vld [vmem:[#allocation6 + $0x40] sm:$0xf]
    %v525 = vld [vmem:[#allocation6 + $0x44] sm:$0xf]
    %v526 = vld [vmem:[#allocation6 + $0x48] sm:$0xf]
    %v527 = vld [vmem:[#allocation6 + $0x4c] sm:$0xf]
    %v528 = vld [vmem:[#allocation6 + $0x60] sm:$0xf]
    %v529 = vld [vmem:[#allocation6 + $0x64] sm:$0xf]
    %v530 = vld [vmem:[#allocation6 + $0x68] sm:$0xf]
    %v531 = vld [vmem:[#allocation6 + $0x6c] sm:$0xf]
    %v532 = vld [vmem:[#allocation6 + $0x80] sm:$0xf]
    %v533 = vld [vmem:[#allocation6 + $0x84] sm:$0xf]
    %v534 = vld [vmem:[#allocation6 + $0x88] sm:$0xf]
    %v535 = vld [vmem:[#allocation6 + $0x8c] sm:$0xf]
    %v536 = vld [vmem:[#allocation6 + $0xa0] sm:$0xf]
    %v537 = vld [vmem:[#allocation6 + $0xa4] sm:$0xf]
    %v538 = vld [vmem:[#allocation6 + $0xa8] sm:$0xf]
    %v539 = vld [vmem:[#allocation6 + $0xac] sm:$0xf]
    %v540 = vld [vmem:[#allocation6 + $0xc0] sm:$0xf]
    %v541 = vld [vmem:[#allocation6 + $0xc4] sm:$0xf]
    %v542 = vld [vmem:[#allocation6 + $0xc8] sm:$0xf]
    %v543 = vld [vmem:[#allocation6 + $0xcc] sm:$0xf]
    %v544 = vld [vmem:[#allocation6 + $0xe0] sm:$0xf]
    %v545 = vld [vmem:[#allocation6 + $0xe4] sm:$0xf]
    %v546 = vld [vmem:[#allocation6 + $0xe8] sm:$0xf]
    %v547 = vld [vmem:[#allocation6 + $0xec] sm:$0xf]
    %v548 = vld [vmem:[#allocation6 + $0x10] sm:$0xf]
    %v549 = vld [vmem:[#allocation6 + $0x14] sm:$0xf]
    %v550 = vld [vmem:[#allocation6 + $0x18] sm:$0xf]
    %v551 = vld [vmem:[#allocation6 + $0x1c] sm:$0xf]
    %v552 = vld [vmem:[#allocation6 + $0x30] sm:$0xf]
    %v553 = vld [vmem:[#allocation6 + $0x34] sm:$0xf]
    %v554 = vld [vmem:[#allocation6 + $0x38] sm:$0xf]
    %v555 = vld [vmem:[#allocation6 + $0x3c] sm:$0xf]
    %v556 = vld [vmem:[#allocation6 + $0x50] sm:$0xf]
    %v557 = vld [vmem:[#allocation6 + $0x54] sm:$0xf]
    %v558 = vld [vmem:[#allocation6 + $0x58] sm:$0xf]
    %v559 = vld [vmem:[#allocation6 + $0x5c] sm:$0xf]
    %v560 = vld [vmem:[#allocation6 + $0x70] sm:$0xf]
    %v561 = vld [vmem:[#allocation6 + $0x74] sm:$0xf]
    %v562 = vld [vmem:[#allocation6 + $0x78] sm:$0xf]
    %v563 = vld [vmem:[#allocation6 + $0x7c] sm:$0xf]
    %v564 = vld [vmem:[#allocation6 + $0x90] sm:$0xf]
    %v565 = vld [vmem:[#allocation6 + $0x94] sm:$0xf]
    %v566 = vld [vmem:[#allocation6 + $0x98] sm:$0xf]
    %v567 = vld [vmem:[#allocation6 + $0x9c] sm:$0xf]
    %v568 = vld [vmem:[#allocation6 + $0xb0] sm:$0xf]
    %v569 = vld [vmem:[#allocation6 + $0xb4] sm:$0xf]
    %v570 = vld [vmem:[#allocation6 + $0xb8] sm:$0xf]
    %v571 = vld [vmem:[#allocation6 + $0xbc] sm:$0xf]
    %v572 = vld [vmem:[#allocation6 + $0xd0] sm:$0xf]
    %v573 = vld [vmem:[#allocation6 + $0xd4] sm:$0xf]
    %v574 = vld [vmem:[#allocation6 + $0xd8] sm:$0xf]
    %v575 = vld [vmem:[#allocation6 + $0xdc] sm:$0xf]
    %v576 = vld [vmem:[#allocation6 + $0xf0] sm:$0xf]
    %v577 = vld [vmem:[#allocation6 + $0xf4] sm:$0xf]
    %v578 = vld [vmem:[#allocation6 + $0xf8] sm:$0xf]
    %v579 = vld [vmem:[#allocation6 + $0xfc] sm:$0xf]
    %v580 = vcombine.high %v86, %v86
    %v582 = vunpack.c.l.s4 1966171168
    %v583 = vunpack.c.0.s8 %v582
    %v584 = vlaneseq
    %v585 = vshrl.u32 %v584, 7
    %v586 = vsub.s32 %v583, %v585
    %v587 = vrot.slane %v86, %v586
    %v589 = vunpack.c.l.s4 1966171168
    %v590 = vunpack.c.0.s8 %v589
    %v591 = vlaneseq
    %v592 = vshrl.u32 %v591, 7
    %v593 = vsub.s32 %v590, %v592
    %v594 = vrot.slane %v580, %v593
    %v595 = vcombine.high %v587, %v587
    %v596 = vcombine.high %v594, %v594
    %v598 = vunpack.c.l.s4 1966171168
    %v599 = vunpack.c.0.s8 %v598
    %v600 = vlaneseq
    %v601 = vshrl.u32 %v600, 7
    %v602 = vsub.s32 %v599, %v601
    %v603 = vrot.slane %v587, %v602
    %v605 = vunpack.c.l.s4 1966171168
    %v606 = vunpack.c.0.s8 %v605
    %v607 = vlaneseq
    %v608 = vshrl.u32 %v607, 7
    %v609 = vsub.s32 %v606, %v608
    %v610 = vrot.slane %v594, %v609
    %v612 = vunpack.c.l.s4 1966171168
    %v613 = vunpack.c.0.s8 %v612
    %v614 = vlaneseq
    %v615 = vshrl.u32 %v614, 7
    %v616 = vsub.s32 %v613, %v615
    %v617 = vrot.slane %v595, %v616
    %v619 = vunpack.c.l.s4 1966171168
    %v620 = vunpack.c.0.s8 %v619
    %v621 = vlaneseq
    %v622 = vshrl.u32 %v621, 7
    %v623 = vsub.s32 %v620, %v622
    %v624 = vrot.slane %v596, %v623
    %v625 = vcombine.high %v603, %v603
    %v626 = vcombine.high %v610, %v610
    %v627 = vcombine.high %v617, %v617
    %v628 = vcombine.high %v624, %v624
    %v638 = vcombine.high %v511, %v511
    %v640 = vunpack.c.l.s4 1966171168
    %v641 = vunpack.c.0.s8 %v640
    %v642 = vlaneseq
    %v643 = vshrl.u32 %v642, 7
    %v644 = vsub.s32 %v641, %v643
    %v645 = vrot.slane %v511, %v644
    %v647 = vunpack.c.l.s4 1966171168
    %v648 = vunpack.c.0.s8 %v647
    %v649 = vlaneseq
    %v650 = vshrl.u32 %v649, 7
    %v651 = vsub.s32 %v648, %v650
    %v652 = vrot.slane %v638, %v651
    %v653 = vcombine.high %v645, %v645
    %v654 = vcombine.high %v652, %v652
    %v656 = vunpack.c.l.s4 1966171168
    %v657 = vunpack.c.0.s8 %v656
    %v658 = vlaneseq
    %v659 = vshrl.u32 %v658, 7
    %v660 = vsub.s32 %v657, %v659
    %v661 = vrot.slane %v645, %v660
    %v663 = vunpack.c.l.s4 1966171168
    %v664 = vunpack.c.0.s8 %v663
    %v665 = vlaneseq
    %v666 = vshrl.u32 %v665, 7
    %v667 = vsub.s32 %v664, %v666
    %v668 = vrot.slane %v652, %v667
    %v670 = vunpack.c.l.s4 1966171168
    %v671 = vunpack.c.0.s8 %v670
    %v672 = vlaneseq
    %v673 = vshrl.u32 %v672, 7
    %v674 = vsub.s32 %v671, %v673
    %v675 = vrot.slane %v653, %v674
    %v677 = vunpack.c.l.s4 1966171168
    %v678 = vunpack.c.0.s8 %v677
    %v679 = vlaneseq
    %v680 = vshrl.u32 %v679, 7
    %v681 = vsub.s32 %v678, %v680
    %v682 = vrot.slane %v654, %v681
    %v683 = vcombine.high %v661, %v661
    %v684 = vcombine.high %v668, %v668
    %v685 = vcombine.high %v675, %v675
    %v686 = vcombine.high %v682, %v682
    %v687 = vlaneseq
    %v688 = vshrl.u32 %v687, 7
    %v689 = vsub.s32 0, %v688
    %v690 = vrot.slane %v661, %v689
    %v691 = vlaneseq
    %v692 = vshrl.u32 %v691, 7
    %v693 = vsub.s32 0, %v692
    %v694 = vrot.slane %v675, %v693
    %v695 = vlaneseq
    %v696 = vshrl.u32 %v695, 7
    %v697 = vsub.s32 0, %v696
    %v698 = vrot.slane %v683, %v697
    %v699 = vlaneseq
    %v700 = vshrl.u32 %v699, 7
    %v701 = vsub.s32 0, %v700
    %v702 = vrot.slane %v685, %v701
    %v703 = vlaneseq
    %v704 = vshrl.u32 %v703, 7
    %v705 = vsub.s32 0, %v704
    %v706 = vrot.slane %v668, %v705
    %v707 = vlaneseq
    %v708 = vshrl.u32 %v707, 7
    %v709 = vsub.s32 0, %v708
    %v710 = vrot.slane %v682, %v709
    %v711 = vlaneseq
    %v712 = vshrl.u32 %v711, 7
    %v713 = vsub.s32 0, %v712
    %v714 = vrot.slane %v684, %v713
    %v715 = vlaneseq
    %v716 = vshrl.u32 %v715, 7
    %v717 = vsub.s32 0, %v716
    %v718 = vrot.slane %v686, %v717
    %719 = vrot.lane.b32.xlu0 %v690, 64
    %v720 = vpop.permute.xlu0 %719
    %721 = vrot.lane.b32.xlu0 %v694, 64
    %v722 = vpop.permute.xlu0 %721
    %723 = vrot.lane.b32.xlu0 %v698, 64
    %v724 = vpop.permute.xlu0 %723
    %725 = vrot.lane.b32.xlu0 %v702, 64
    %v726 = vpop.permute.xlu0 %725
    %727 = vrot.lane.b32.xlu0 %v706, 64
    %v728 = vpop.permute.xlu0 %727
    %729 = vrot.lane.b32.xlu0 %v710, 64
    %v730 = vpop.permute.xlu0 %729
    %731 = vrot.lane.b32.xlu0 %v714, 64
    %v732 = vpop.permute.xlu0 %731
    %733 = vrot.lane.b32.xlu0 %v718, 64
    %v734 = vpop.permute.xlu0 %733
    %vm743 = vcmask 1040384
    %v744 = vsel %vm743, %v603, %v720
    %v745 = vsel %vm743, %v617, %v722
    %v746 = vsel %vm743, %v625, %v724
    %v747 = vsel %vm743, %v627, %v726
    %v748 = vsel %vm743, %v610, %v728
    %v749 = vsel %vm743, %v624, %v730
    %v750 = vsel %vm743, %v626, %v732
    %v751 = vsel %vm743, %v628, %v734
    %v752 = vpack.c.bf16 %v744, %v744
    %v753 = vpack.c.bf16 %v745, %v745
    %v754 = vpack.c.bf16 %v746, %v746
    %v755 = vpack.c.bf16 %v747, %v747
    %v756 = vpack.c.bf16 %v748, %v748
    %v757 = vpack.c.bf16 %v749, %v749
    %v758 = vpack.c.bf16 %v750, %v750
    %v759 = vpack.c.bf16 %v751, %v751
    %v760 = vsub.f32 %v86, %v237
    %v762 = vcombine.high %v760, %v760
    %v764 = vunpack.c.l.s4 1966171168
    %v765 = vunpack.c.0.s8 %v764
    %v766 = vlaneseq
    %v767 = vshrl.u32 %v766, 7
    %v768 = vsub.s32 %v765, %v767
    %v769 = vrot.slane %v760, %v768
    %v771 = vunpack.c.l.s4 1966171168
    %v772 = vunpack.c.0.s8 %v771
    %v773 = vlaneseq
    %v774 = vshrl.u32 %v773, 7
    %v775 = vsub.s32 %v772, %v774
    %v776 = vrot.slane %v762, %v775
    %v777 = vcombine.high %v769, %v769
    %v778 = vcombine.high %v776, %v776
    %v780 = vunpack.c.l.s4 1966171168
    %v781 = vunpack.c.0.s8 %v780
    %v782 = vlaneseq
    %v783 = vshrl.u32 %v782, 7
    %v784 = vsub.s32 %v781, %v783
    %v785 = vrot.slane %v769, %v784
    %v787 = vunpack.c.l.s4 1966171168
    %v788 = vunpack.c.0.s8 %v787
    %v789 = vlaneseq
    %v790 = vshrl.u32 %v789, 7
    %v791 = vsub.s32 %v788, %v790
    %v792 = vrot.slane %v776, %v791
    %v794 = vunpack.c.l.s4 1966171168
    %v795 = vunpack.c.0.s8 %v794
    %v796 = vlaneseq
    %v797 = vshrl.u32 %v796, 7
    %v798 = vsub.s32 %v795, %v797
    %v799 = vrot.slane %v777, %v798
    %v801 = vunpack.c.l.s4 1966171168
    %v802 = vunpack.c.0.s8 %v801
    %v803 = vlaneseq
    %v804 = vshrl.u32 %v803, 7
    %v805 = vsub.s32 %v802, %v804
    %v806 = vrot.slane %v778, %v805
    %v807 = vcombine.high %v785, %v785
    %v808 = vcombine.high %v792, %v792
    %v809 = vcombine.high %v799, %v799
    %v810 = vcombine.high %v806, %v806
    %v819 = vsel %vm743, %v785, %v720
    %v820 = vsel %vm743, %v799, %v722
    %v821 = vsel %vm743, %v807, %v724
    %v822 = vsel %vm743, %v809, %v726
    %v823 = vsel %vm743, %v792, %v728
    %v824 = vsel %vm743, %v806, %v730
    %v825 = vsel %vm743, %v808, %v732
    %v826 = vsel %vm743, %v810, %v734
    %v827 = vpack.c.bf16 %v819, %v819
    %v828 = vpack.c.bf16 %v820, %v820
    %v829 = vpack.c.bf16 %v821, %v821
    %v830 = vpack.c.bf16 %v822, %v822
    %v831 = vpack.c.bf16 %v823, %v823
    %v832 = vpack.c.bf16 %v824, %v824
    %v833 = vpack.c.bf16 %v825, %v825
    %v834 = vpack.c.bf16 %v826, %v826
    %836 = vrot.lane.b32.xlu0 %v752, 32
    %v837 = vpop.permute.xlu0 %836
    %v842 = vunpack.c.l.b16 %v516
    %v843 = vunpack.c.l.b16 %v517
    %v844 = vunpack.c.l.b16 %v518
    %v845 = vunpack.c.l.b16 %v519
    %v846 = vpack.c.b16 %v843, %v842
    %v847 = vpack.c.b16 %v845, %v844
    %v851 = vsel %vm247, %v837, 0
    %853 = vmatprep.subr.bf16.mxu0 0
    %854 = vmatpush1.bf16.msra.mxu0 %v846
    %855 = vmatprep.subr.bf16.mxu0 0
    %856 = vmatpush1.bf16.msra.mxu0 %v847
    %857 = vmatprep.subr.bf16.mxu0 0
    %858 = vmatpush1.bf16.msra.mxu0 0
    %859 = vmatprep.subr.bf16.mxu0 0
    %860 = vmatpush1.bf16.msra.mxu0 0
    %861 = vmatprep.subr.bf16.mxu0 0
    %862 = vmatpush1.bf16.msra.mxu0 0
    %863 = vmatprep.subr.bf16.mxu0 0
    %864 = vmatpush1.bf16.msra.mxu0 0
    %865 = vmatprep.subr.bf16.mxu0 0
    %866 = vmatpush1.bf16.msra.mxu0 0
    %867 = vmatprep.subr.bf16.mxu0 0
    %868 = vmatpush1.bf16.msra.mxu0 0
    %869 = vmatprep.subr.bf16.mxu0 0
    %870 = vmatpush1.bf16.msra.mxu0 0
    %871 = vmatprep.subr.bf16.mxu0 0
    %872 = vmatpush1.bf16.msra.mxu0 0
    %873 = vmatprep.subr.bf16.mxu0 0
    %874 = vmatpush1.bf16.msra.mxu0 0
    %875 = vmatprep.subr.bf16.mxu0 0
    %876 = vmatpush1.bf16.msra.mxu0 0
    %877 = vmatprep.subr.bf16.mxu0 0
    %878 = vmatpush1.bf16.msra.mxu0 0
    %879 = vmatprep.subr.bf16.mxu0 0
    %880 = vmatpush1.bf16.msra.mxu0 0
    %881 = vmatprep.subr.bf16.mxu0 0
    %882 = vmatpush1.bf16.msra.mxu0 0
    %883 = vmatprep.subr.bf16.mxu0 0
    %884 = vmatpush1.bf16.msra.mxu0 0
    %885 = vmatprep.mubr.bf16.mxu0 0
    %886 = vmatmul.mubr.bf16.gmra.mrb[0].mxu0 %v851
    %v887 = vpop.f32.mrb[0].mxu0
    %v888 = vadd.f32 0.0, %v887
    %v889 = vpop.f32.mrb[0].mxu0
    %v890 = vpop.f32.mrb[0].mxu0
    %v891 = vpop.f32.mrb[0].mxu0
    %892 = vdwg.mxu0
    %894 = vrot.lane.b32.xlu0 %v753, 32
    %v895 = vpop.permute.xlu0 %894
    %v900 = vunpack.c.l.b16 %v520
    %v901 = vunpack.c.l.b16 %v521
    %v902 = vunpack.c.l.b16 %v522
    %v903 = vunpack.c.l.b16 %v523
    %v904 = vpack.c.b16 %v901, %v900
    %v905 = vpack.c.b16 %v903, %v902
    %v909 = vsel %vm247, %v895, 0
    %911 = vmatprep.subr.bf16.mxu0 0
    %912 = vmatpush1.bf16.msra.mxu0 %v904
    %913 = vmatprep.subr.bf16.mxu0 0
    %914 = vmatpush1.bf16.msra.mxu0 %v905
    %915 = vmatprep.subr.bf16.mxu0 0
    %916 = vmatpush1.bf16.msra.mxu0 0
    %917 = vmatprep.subr.bf16.mxu0 0
    %918 = vmatpush1.bf16.msra.mxu0 0
    %919 = vmatprep.subr.bf16.mxu0 0
    %920 = vmatpush1.bf16.msra.mxu0 0
    %921 = vmatprep.subr.bf16.mxu0 0
    %922 = vmatpush1.bf16.msra.mxu0 0
    %923 = vmatprep.subr.bf16.mxu0 0
    %924 = vmatpush1.bf16.msra.mxu0 0
    %925 = vmatprep.subr.bf16.mxu0 0
    %926 = vmatpush1.bf16.msra.mxu0 0
    %927 = vmatprep.subr.bf16.mxu0 0
    %928 = vmatpush1.bf16.msra.mxu0 0
    %929 = vmatprep.subr.bf16.mxu0 0
    %930 = vmatpush1.bf16.msra.mxu0 0
    %931 = vmatprep.subr.bf16.mxu0 0
    %932 = vmatpush1.bf16.msra.mxu0 0
    %933 = vmatprep.subr.bf16.mxu0 0
    %934 = vmatpush1.bf16.msra.mxu0 0
    %935 = vmatprep.subr.bf16.mxu0 0
    %936 = vmatpush1.bf16.msra.mxu0 0
    %937 = vmatprep.subr.bf16.mxu0 0
    %938 = vmatpush1.bf16.msra.mxu0 0
    %939 = vmatprep.subr.bf16.mxu0 0
    %940 = vmatpush1.bf16.msra.mxu0 0
    %941 = vmatprep.subr.bf16.mxu0 0
    %942 = vmatpush1.bf16.msra.mxu0 0
    %943 = vmatprep.mubr.bf16.mxu0 0
    %944 = vmatmul.mubr.bf16.gmra.mrb[0].mxu0 %v909
    %v945 = vpop.f32.mrb[0].mxu0
    %v946 = vadd.f32 0.0, %v945
    %v947 = vpop.f32.mrb[0].mxu0
    %v948 = vpop.f32.mrb[0].mxu0
    %v949 = vpop.f32.mrb[0].mxu0
    %950 = vdwg.mxu0
    %952 = vrot.lane.b32.xlu0 %v754, 32
    %v953 = vpop.permute.xlu0 %952
    %v958 = vunpack.c.l.b16 %v524
    %v959 = vunpack.c.l.b16 %v525
    %v960 = vunpack.c.l.b16 %v526
    %v961 = vunpack.c.l.b16 %v527
    %v962 = vpack.c.b16 %v959, %v958
    %v963 = vpack.c.b16 %v961, %v960
    %v967 = vsel %vm247, %v953, 0
    %969 = vmatprep.subr.bf16.mxu0 0
    %970 = vmatpush1.bf16.msra.mxu0 %v962
    %971 = vmatprep.subr.bf16.mxu0 0
    %972 = vmatpush1.bf16.msra.mxu0 %v963
    %973 = vmatprep.subr.bf16.mxu0 0
    %974 = vmatpush1.bf16.msra.mxu0 0
    %975 = vmatprep.subr.bf16.mxu0 0
    %976 = vmatpush1.bf16.msra.mxu0 0
    %977 = vmatprep.subr.bf16.mxu0 0
    %978 = vmatpush1.bf16.msra.mxu0 0
    %979 = vmatprep.subr.bf16.mxu0 0
    %980 = vmatpush1.bf16.msra.mxu0 0
    %981 = vmatprep.subr.bf16.mxu0 0
    %982 = vmatpush1.bf16.msra.mxu0 0
    %983 = vmatprep.subr.bf16.mxu0 0
    %984 = vmatpush1.bf16.msra.mxu0 0
    %985 = vmatprep.subr.bf16.mxu0 0
    %986 = vmatpush1.bf16.msra.mxu0 0
    %987 = vmatprep.subr.bf16.mxu0 0
    %988 = vmatpush1.bf16.msra.mxu0 0
    %989 = vmatprep.subr.bf16.mxu0 0
    %990 = vmatpush1.bf16.msra.mxu0 0
    %991 = vmatprep.subr.bf16.mxu0 0
    %992 = vmatpush1.bf16.msra.mxu0 0
    %993 = vmatprep.subr.bf16.mxu0 0
    %994 = vmatpush1.bf16.msra.mxu0 0
    %995 = vmatprep.subr.bf16.mxu0 0
    %996 = vmatpush1.bf16.msra.mxu0 0
    %997 = vmatprep.subr.bf16.mxu0 0
    %998 = vmatpush1.bf16.msra.mxu0 0
    %999 = vmatprep.subr.bf16.mxu0 0
    %1000 = vmatpush1.bf16.msra.mxu0 0
    %1001 = vmatprep.mubr.bf16.mxu0 0
    %1002 = vmatmul.mubr.bf16.gmra.mrb[0].mxu0 %v967
    %v1003 = vpop.f32.mrb[0].mxu0
    %v1004 = vadd.f32 0.0, %v1003
    %v1005 = vpop.f32.mrb[0].mxu0
    %v1006 = vpop.f32.mrb[0].mxu0
    %v1007 = vpop.f32.mrb[0].mxu0
    %1008 = vdwg.mxu0
    %1010 = vrot.lane.b32.xlu0 %v755, 32
    %v1011 = vpop.permute.xlu0 %1010
    %v1016 = vunpack.c.l.b16 %v528
    %v1017 = vunpack.c.l.b16 %v529
    %v1018 = vunpack.c.l.b16 %v530
    %v1019 = vunpack.c.l.b16 %v531
    %v1020 = vpack.c.b16 %v1017, %v1016
    %v1021 = vpack.c.b16 %v1019, %v1018
    %v1025 = vsel %vm247, %v1011, 0
    %1027 = vmatprep.subr.bf16.mxu0 0
    %1028 = vmatpush1.bf16.msra.mxu0 %v1020
    %1029 = vmatprep.subr.bf16.mxu0 0
    %1030 = vmatpush1.bf16.msra.mxu0 %v1021
    %1031 = vmatprep.subr.bf16.mxu0 0
    %1032 = vmatpush1.bf16.msra.mxu0 0
    %1033 = vmatprep.subr.bf16.mxu0 0
    %1034 = vmatpush1.bf16.msra.mxu0 0
    %1035 = vmatprep.subr.bf16.mxu0 0
    %1036 = vmatpush1.bf16.msra.mxu0 0
    %1037 = vmatprep.subr.bf16.mxu0 0
    %1038 = vmatpush1.bf16.msra.mxu0 0
    %1039 = vmatprep.subr.bf16.mxu0 0
    %1040 = vmatpush1.bf16.msra.mxu0 0
    %1041 = vmatprep.subr.bf16.mxu0 0
    %1042 = vmatpush1.bf16.msra.mxu0 0
    %1043 = vmatprep.subr.bf16.mxu0 0
    %1044 = vmatpush1.bf16.msra.mxu0 0
    %1045 = vmatprep.subr.bf16.mxu0 0
    %1046 = vmatpush1.bf16.msra.mxu0 0
    %1047 = vmatprep.subr.bf16.mxu0 0
    %1048 = vmatpush1.bf16.msra.mxu0 0
    %1049 = vmatprep.subr.bf16.mxu0 0
    %1050 = vmatpush1.bf16.msra.mxu0 0
    %1051 = vmatprep.subr.bf16.mxu0 0
    %1052 = vmatpush1.bf16.msra.mxu0 0
    %1053 = vmatprep.subr.bf16.mxu0 0
    %1054 = vmatpush1.bf16.msra.mxu0 0
    %1055 = vmatprep.subr.bf16.mxu0 0
    %1056 = vmatpush1.bf16.msra.mxu0 0
    %1057 = vmatprep.subr.bf16.mxu0 0
    %1058 = vmatpush1.bf16.msra.mxu0 0
    %1059 = vmatprep.mubr.bf16.mxu0 0
    %1060 = vmatmul.mubr.bf16.gmra.mrb[0].mxu0 %v1025
    %v1061 = vpop.f32.mrb[0].mxu0
    %v1062 = vadd.f32 0.0, %v1061
    %v1063 = vpop.f32.mrb[0].mxu0
    %v1064 = vpop.f32.mrb[0].mxu0
    %v1065 = vpop.f32.mrb[0].mxu0
    %1066 = vdwg.mxu0
    %1068 = vrot.lane.b32.xlu0 %v756, 32
    %v1069 = vpop.permute.xlu0 %1068
    %v1074 = vunpack.c.l.b16 %v532
    %v1075 = vunpack.c.l.b16 %v533
    %v1076 = vunpack.c.l.b16 %v534
    %v1077 = vunpack.c.l.b16 %v535
    %v1078 = vpack.c.b16 %v1075, %v1074
    %v1079 = vpack.c.b16 %v1077, %v1076
    %v1083 = vsel %vm247, %v1069, 0
    %1085 = vmatprep.subr.bf16.mxu0 0
    %1086 = vmatpush1.bf16.msra.mxu0 %v1078
    %1087 = vmatprep.subr.bf16.mxu0 0
    %1088 = vmatpush1.bf16.msra.mxu0 %v1079
    %1089 = vmatprep.subr.bf16.mxu0 0
    %1090 = vmatpush1.bf16.msra.mxu0 0
    %1091 = vmatprep.subr.bf16.mxu0 0
    %1092 = vmatpush1.bf16.msra.mxu0 0
    %1093 = vmatprep.subr.bf16.mxu0 0
    %1094 = vmatpush1.bf16.msra.mxu0 0
    %1095 = vmatprep.subr.bf16.mxu0 0
    %1096 = vmatpush1.bf16.msra.mxu0 0
    %1097 = vmatprep.subr.bf16.mxu0 0
    %1098 = vmatpush1.bf16.msra.mxu0 0
    %1099 = vmatprep.subr.bf16.mxu0 0
    %1100 = vmatpush1.bf16.msra.mxu0 0
    %1101 = vmatprep.subr.bf16.mxu0 0
    %1102 = vmatpush1.bf16.msra.mxu0 0
    %1103 = vmatprep.subr.bf16.mxu0 0
    %1104 = vmatpush1.bf16.msra.mxu0 0
    %1105 = vmatprep.subr.bf16.mxu0 0
    %1106 = vmatpush1.bf16.msra.mxu0 0
    %1107 = vmatprep.subr.bf16.mxu0 0
    %1108 = vmatpush1.bf16.msra.mxu0 0
    %1109 = vmatprep.subr.bf16.mxu0 0
    %1110 = vmatpush1.bf16.msra.mxu0 0
    %1111 = vmatprep.subr.bf16.mxu0 0
    %1112 = vmatpush1.bf16.msra.mxu0 0
    %1113 = vmatprep.subr.bf16.mxu0 0
    %1114 = vmatpush1.bf16.msra.mxu0 0
    %1115 = vmatprep.subr.bf16.mxu0 0
    %1116 = vmatpush1.bf16.msra.mxu0 0
    %1117 = vmatprep.mubr.bf16.mxu0 0
    %1118 = vmatmul.mubr.bf16.gmra.mrb[0].mxu0 %v1083
    %v1119 = vpop.f32.mrb[0].mxu0
    %v1120 = vadd.f32 0.0, %v1119
    %v1121 = vpop.f32.mrb[0].mxu0
    %v1122 = vpop.f32.mrb[0].mxu0
    %v1123 = vpop.f32.mrb[0].mxu0
    %1124 = vdwg.mxu0
    %1126 = vrot.lane.b32.xlu0 %v757, 32
    %v1127 = vpop.permute.xlu0 %1126
    %v1132 = vunpack.c.l.b16 %v536
    %v1133 = vunpack.c.l.b16 %v537
    %v1134 = vunpack.c.l.b16 %v538
    %v1135 = vunpack.c.l.b16 %v539
    %v1136 = vpack.c.b16 %v1133, %v1132
    %v1137 = vpack.c.b16 %v1135, %v1134
    %v1141 = vsel %vm247, %v1127, 0
    %1143 = vmatprep.subr.bf16.mxu0 0
    %1144 = vmatpush1.bf16.msra.mxu0 %v1136
    %1145 = vmatprep.subr.bf16.mxu0 0
    %1146 = vmatpush1.bf16.msra.mxu0 %v1137
    %1147 = vmatprep.subr.bf16.mxu0 0
    %1148 = vmatpush1.bf16.msra.mxu0 0
    %1149 = vmatprep.subr.bf16.mxu0 0
    %1150 = vmatpush1.bf16.msra.mxu0 0
    %1151 = vmatprep.subr.bf16.mxu0 0
    %1152 = vmatpush1.bf16.msra.mxu0 0
    %1153 = vmatprep.subr.bf16.mxu0 0
    %1154 = vmatpush1.bf16.msra.mxu0 0
    %1155 = vmatprep.subr.bf16.mxu0 0
    %1156 = vmatpush1.bf16.msra.mxu0 0
    %1157 = vmatprep.subr.bf16.mxu0 0
    %1158 = vmatpush1.bf16.msra.mxu0 0
    %1159 = vmatprep.subr.bf16.mxu0 0
    %1160 = vmatpush1.bf16.msra.mxu0 0
    %1161 = vmatprep.subr.bf16.mxu0 0
    %1162 = vmatpush1.bf16.msra.mxu0 0
    %1163 = vmatprep.subr.bf16.mxu0 0
    %1164 = vmatpush1.bf16.msra.mxu0 0
    %1165 = vmatprep.subr.bf16.mxu0 0
    %1166 = vmatpush1.bf16.msra.mxu0 0
    %1167 = vmatprep.subr.bf16.mxu0 0
    %1168 = vmatpush1.bf16.msra.mxu0 0
    %1169 = vmatprep.subr.bf16.mxu0 0
    %1170 = vmatpush1.bf16.msra.mxu0 0
    %1171 = vmatprep.subr.bf16.mxu0 0
    %1172 = vmatpush1.bf16.msra.mxu0 0
    %1173 = vmatprep.subr.bf16.mxu0 0
    %1174 = vmatpush1.bf16.msra.mxu0 0
    %1175 = vmatprep.mubr.bf16.mxu0 0
    %1176 = vmatmul.mubr.bf16.gmra.mrb[0].mxu0 %v1141
    %v1177 = vpop.f32.mrb[0].mxu0
    %v1178 = vadd.f32 0.0, %v1177
    %v1179 = vpop.f32.mrb[0].mxu0
    %v1180 = vpop.f32.mrb[0].mxu0
    %v1181 = vpop.f32.mrb[0].mxu0
    %1182 = vdwg.mxu0
    %1184 = vrot.lane.b32.xlu0 %v758, 32
    %v1185 = vpop.permute.xlu0 %1184
    %v1190 = vunpack.c.l.b16 %v540
    %v1191 = vunpack.c.l.b16 %v541
    %v1192 = vunpack.c.l.b16 %v542
    %v1193 = vunpack.c.l.b16 %v543
    %v1194 = vpack.c.b16 %v1191, %v1190
    %v1195 = vpack.c.b16 %v1193, %v1192
    %v1199 = vsel %vm247, %v1185, 0
    %1201 = vmatprep.subr.bf16.mxu0 0
    %1202 = vmatpush1.bf16.msra.mxu0 %v1194
    %1203 = vmatprep.subr.bf16.mxu0 0
    %1204 = vmatpush1.bf16.msra.mxu0 %v1195
    %1205 = vmatprep.subr.bf16.mxu0 0
    %1206 = vmatpush1.bf16.msra.mxu0 0
    %1207 = vmatprep.subr.bf16.mxu0 0
    %1208 = vmatpush1.bf16.msra.mxu0 0
    %1209 = vmatprep.subr.bf16.mxu0 0
    %1210 = vmatpush1.bf16.msra.mxu0 0
    %1211 = vmatprep.subr.bf16.mxu0 0
    %1212 = vmatpush1.bf16.msra.mxu0 0
    %1213 = vmatprep.subr.bf16.mxu0 0
    %1214 = vmatpush1.bf16.msra.mxu0 0
    %1215 = vmatprep.subr.bf16.mxu0 0
    %1216 = vmatpush1.bf16.msra.mxu0 0
    %1217 = vmatprep.subr.bf16.mxu0 0
    %1218 = vmatpush1.bf16.msra.mxu0 0
    %1219 = vmatprep.subr.bf16.mxu0 0
    %1220 = vmatpush1.bf16.msra.mxu0 0
    %1221 = vmatprep.subr.bf16.mxu0 0
    %1222 = vmatpush1.bf16.msra.mxu0 0
    %1223 = vmatprep.subr.bf16.mxu0 0
    %1224 = vmatpush1.bf16.msra.mxu0 0
    %1225 = vmatprep.subr.bf16.mxu0 0
    %1226 = vmatpush1.bf16.msra.mxu0 0
    %1227 = vmatprep.subr.bf16.mxu0 0
    %1228 = vmatpush1.bf16.msra.mxu0 0
    %1229 = vmatprep.subr.bf16.mxu0 0
    %1230 = vmatpush1.bf16.msra.mxu0 0
    %1231 = vmatprep.subr.bf16.mxu0 0
    %1232 = vmatpush1.bf16.msra.mxu0 0
    %1233 = vmatprep.mubr.bf16.mxu0 0
    %1234 = vmatmul.mubr.bf16.gmra.mrb[0].mxu0 %v1199
    %v1235 = vpop.f32.mrb[0].mxu0
    %v1236 = vadd.f32 0.0, %v1235
    %v1237 = vpop.f32.mrb[0].mxu0
    %v1238 = vpop.f32.mrb[0].mxu0
    %v1239 = vpop.f32.mrb[0].mxu0
    %1240 = vdwg.mxu0
    %1242 = vrot.lane.b32.xlu0 %v759, 32
    %v1243 = vpop.permute.xlu0 %1242
    %v1248 = vunpack.c.l.b16 %v544
    %v1249 = vunpack.c.l.b16 %v545
    %v1250 = vunpack.c.l.b16 %v546
    %v1251 = vunpack.c.l.b16 %v547
    %v1252 = vpack.c.b16 %v1249, %v1248
    %v1253 = vpack.c.b16 %v1251, %v1250
    %v1257 = vsel %vm247, %v1243, 0
    %1259 = vmatprep.subr.bf16.mxu0 0
    %1260 = vmatpush1.bf16.msra.mxu0 %v1252
    %1261 = vmatprep.subr.bf16.mxu0 0
    %1262 = vmatpush1.bf16.msra.mxu0 %v1253
    %1263 = vmatprep.subr.bf16.mxu0 0
    %1264 = vmatpush1.bf16.msra.mxu0 0
    %1265 = vmatprep.subr.bf16.mxu0 0
    %1266 = vmatpush1.bf16.msra.mxu0 0
    %1267 = vmatprep.subr.bf16.mxu0 0
    %1268 = vmatpush1.bf16.msra.mxu0 0
    %1269 = vmatprep.subr.bf16.mxu0 0
    %1270 = vmatpush1.bf16.msra.mxu0 0
    %1271 = vmatprep.subr.bf16.mxu0 0
    %1272 = vmatpush1.bf16.msra.mxu0 0
    %1273 = vmatprep.subr.bf16.mxu0 0
    %1274 = vmatpush1.bf16.msra.mxu0 0
    %1275 = vmatprep.subr.bf16.mxu0 0
    %1276 = vmatpush1.bf16.msra.mxu0 0
    %1277 = vmatprep.subr.bf16.mxu0 0
    %1278 = vmatpush1.bf16.msra.mxu0 0
    %1279 = vmatprep.subr.bf16.mxu0 0
    %1280 = vmatpush1.bf16.msra.mxu0 0
    %1281 = vmatprep.subr.bf16.mxu0 0
    %1282 = vmatpush1.bf16.msra.mxu0 0
    %1283 = vmatprep.subr.bf16.mxu0 0
    %1284 = vmatpush1.bf16.msra.mxu0 0
    %1285 = vmatprep.subr.bf16.mxu0 0
    %1286 = vmatpush1.bf16.msra.mxu0 0
    %1287 = vmatprep.subr.bf16.mxu0 0
    %1288 = vmatpush1.bf16.msra.mxu0 0
    %1289 = vmatprep.subr.bf16.mxu0 0
    %1290 = vmatpush1.bf16.msra.mxu0 0
    %1291 = vmatprep.mubr.bf16.mxu0 0
    %1292 = vmatmul.mubr.bf16.gmra.mrb[0].mxu0 %v1257
    %v1293 = vpop.f32.mrb[0].mxu0
    %v1294 = vadd.f32 0.0, %v1293
    %v1295 = vpop.f32.mrb[0].mxu0
    %v1296 = vpop.f32.mrb[0].mxu0
    %v1297 = vpop.f32.mrb[0].mxu0
    %1298 = vdwg.mxu0
    %1300 = vrot.lane.b32.xlu0 %v827, 64
    %v1301 = vpop.permute.xlu0 %1300
    %v1306 = vunpack.c.l.b16 %v548
    %v1307 = vunpack.c.l.b16 %v549
    %v1308 = vunpack.c.l.b16 %v550
    %v1309 = vunpack.c.l.b16 %v551
    %v1310 = vpack.c.b16 %v1307, %v1306
    %v1311 = vpack.c.b16 %v1309, %v1308
    %v1315 = vsel %vm247, %v1301, 0
    %1317 = vmatprep.subr.bf16.mxu0 0
    %1318 = vmatpush1.bf16.msra.mxu0 %v1310
    %1319 = vmatprep.subr.bf16.mxu0 0
    %1320 = vmatpush1.bf16.msra.mxu0 %v1311
    %1321 = vmatprep.subr.bf16.mxu0 0
    %1322 = vmatpush1.bf16.msra.mxu0 0
    %1323 = vmatprep.subr.bf16.mxu0 0
    %1324 = vmatpush1.bf16.msra.mxu0 0
    %1325 = vmatprep.subr.bf16.mxu0 0
    %1326 = vmatpush1.bf16.msra.mxu0 0
    %1327 = vmatprep.subr.bf16.mxu0 0
    %1328 = vmatpush1.bf16.msra.mxu0 0
    %1329 = vmatprep.subr.bf16.mxu0 0
    %1330 = vmatpush1.bf16.msra.mxu0 0
    %1331 = vmatprep.subr.bf16.mxu0 0
    %1332 = vmatpush1.bf16.msra.mxu0 0
    %1333 = vmatprep.subr.bf16.mxu0 0
    %1334 = vmatpush1.bf16.msra.mxu0 0
    %1335 = vmatprep.subr.bf16.mxu0 0
    %1336 = vmatpush1.bf16.msra.mxu0 0
    %1337 = vmatprep.subr.bf16.mxu0 0
    %1338 = vmatpush1.bf16.msra.mxu0 0
    %1339 = vmatprep.subr.bf16.mxu0 0
    %1340 = vmatpush1.bf16.msra.mxu0 0
    %1341 = vmatprep.subr.bf16.mxu0 0
    %1342 = vmatpush1.bf16.msra.mxu0 0
    %1343 = vmatprep.subr.bf16.mxu0 0
    %1344 = vmatpush1.bf16.msra.mxu0 0
    %1345 = vmatprep.subr.bf16.mxu0 0
    %1346 = vmatpush1.bf16.msra.mxu0 0
    %1347 = vmatprep.subr.bf16.mxu0 0
    %1348 = vmatpush1.bf16.msra.mxu0 0
    %1349 = vmatprep.mubr.bf16.mxu0 0
    %1350 = vmatmul.mubr.bf16.gmra.mrb[0].mxu0 %v1315
    %v1351 = vpop.f32.mrb[0].mxu0
    %v1352 = vadd.f32 0.0, %v1351
    %v1353 = vpop.f32.mrb[0].mxu0
    %v1354 = vpop.f32.mrb[0].mxu0
    %v1355 = vpop.f32.mrb[0].mxu0
    %1356 = vdwg.mxu0
    %1358 = vrot.lane.b32.xlu0 %v828, 64
    %v1359 = vpop.permute.xlu0 %1358
    %v1364 = vunpack.c.l.b16 %v552
    %v1365 = vunpack.c.l.b16 %v553
    %v1366 = vunpack.c.l.b16 %v554
    %v1367 = vunpack.c.l.b16 %v555
    %v1368 = vpack.c.b16 %v1365, %v1364
    %v1369 = vpack.c.b16 %v1367, %v1366
    %v1373 = vsel %vm247, %v1359, 0
    %1375 = vmatprep.subr.bf16.mxu0 0
    %1376 = vmatpush1.bf16.msra.mxu0 %v1368
    %1377 = vmatprep.subr.bf16.mxu0 0
    %1378 = vmatpush1.bf16.msra.mxu0 %v1369
    %1379 = vmatprep.subr.bf16.mxu0 0
    %1380 = vmatpush1.bf16.msra.mxu0 0
    %1381 = vmatprep.subr.bf16.mxu0 0
    %1382 = vmatpush1.bf16.msra.mxu0 0
    %1383 = vmatprep.subr.bf16.mxu0 0
    %1384 = vmatpush1.bf16.msra.mxu0 0
    %1385 = vmatprep.subr.bf16.mxu0 0
    %1386 = vmatpush1.bf16.msra.mxu0 0
    %1387 = vmatprep.subr.bf16.mxu0 0
    %1388 = vmatpush1.bf16.msra.mxu0 0
    %1389 = vmatprep.subr.bf16.mxu0 0
    %1390 = vmatpush1.bf16.msra.mxu0 0
    %1391 = vmatprep.subr.bf16.mxu0 0
    %1392 = vmatpush1.bf16.msra.mxu0 0
    %1393 = vmatprep.subr.bf16.mxu0 0
    %1394 = vmatpush1.bf16.msra.mxu0 0
    %1395 = vmatprep.subr.bf16.mxu0 0
    %1396 = vmatpush1.bf16.msra.mxu0 0
    %1397 = vmatprep.subr.bf16.mxu0 0
    %1398 = vmatpush1.bf16.msra.mxu0 0
    %1399 = vmatprep.subr.bf16.mxu0 0
    %1400 = vmatpush1.bf16.msra.mxu0 0
    %1401 = vmatprep.subr.bf16.mxu0 0
    %1402 = vmatpush1.bf16.msra.mxu0 0
    %1403 = vmatprep.subr.bf16.mxu0 0
    %1404 = vmatpush1.bf16.msra.mxu0 0
    %1405 = vmatprep.subr.bf16.mxu0 0
    %1406 = vmatpush1.bf16.msra.mxu0 0
    %1407 = vmatprep.mubr.bf16.mxu0 0
    %1408 = vmatmul.mubr.bf16.gmra.mrb[0].mxu0 %v1373
    %v1409 = vpop.f32.mrb[0].mxu0
    %v1410 = vadd.f32 0.0, %v1409
    %v1411 = vpop.f32.mrb[0].mxu0
    %v1412 = vpop.f32.mrb[0].mxu0
    %v1413 = vpop.f32.mrb[0].mxu0
    %1414 = vdwg.mxu0
    %1416 = vrot.lane.b32.xlu0 %v829, 64
    %v1417 = vpop.permute.xlu0 %1416
    %v1422 = vunpack.c.l.b16 %v556
    %v1423 = vunpack.c.l.b16 %v557
    %v1424 = vunpack.c.l.b16 %v558
    %v1425 = vunpack.c.l.b16 %v559
    %v1426 = vpack.c.b16 %v1423, %v1422
    %v1427 = vpack.c.b16 %v1425, %v1424
    %v1431 = vsel %vm247, %v1417, 0
    %1433 = vmatprep.subr.bf16.mxu0 0
    %1434 = vmatpush1.bf16.msra.mxu0 %v1426
    %1435 = vmatprep.subr.bf16.mxu0 0
    %1436 = vmatpush1.bf16.msra.mxu0 %v1427
    %1437 = vmatprep.subr.bf16.mxu0 0
    %1438 = vmatpush1.bf16.msra.mxu0 0
    %1439 = vmatprep.subr.bf16.mxu0 0
    %1440 = vmatpush1.bf16.msra.mxu0 0
    %1441 = vmatprep.subr.bf16.mxu0 0
    %1442 = vmatpush1.bf16.msra.mxu0 0
    %1443 = vmatprep.subr.bf16.mxu0 0
    %1444 = vmatpush1.bf16.msra.mxu0 0
    %1445 = vmatprep.subr.bf16.mxu0 0
    %1446 = vmatpush1.bf16.msra.mxu0 0
    %1447 = vmatprep.subr.bf16.mxu0 0
    %1448 = vmatpush1.bf16.msra.mxu0 0
    %1449 = vmatprep.subr.bf16.mxu0 0
    %1450 = vmatpush1.bf16.msra.mxu0 0
    %1451 = vmatprep.subr.bf16.mxu0 0
    %1452 = vmatpush1.bf16.msra.mxu0 0
    %1453 = vmatprep.subr.bf16.mxu0 0
    %1454 = vmatpush1.bf16.msra.mxu0 0
    %1455 = vmatprep.subr.bf16.mxu0 0
    %1456 = vmatpush1.bf16.msra.mxu0 0
    %1457 = vmatprep.subr.bf16.mxu0 0
    %1458 = vmatpush1.bf16.msra.mxu0 0
    %1459 = vmatprep.subr.bf16.mxu0 0
    %1460 = vmatpush1.bf16.msra.mxu0 0
    %1461 = vmatprep.subr.bf16.mxu0 0
    %1462 = vmatpush1.bf16.msra.mxu0 0
    %1463 = vmatprep.subr.bf16.mxu0 0
    %1464 = vmatpush1.bf16.msra.mxu0 0
    %1465 = vmatprep.mubr.bf16.mxu0 0
    %1466 = vmatmul.mubr.bf16.gmra.mrb[0].mxu0 %v1431
    %v1467 = vpop.f32.mrb[0].mxu0
    %v1468 = vadd.f32 0.0, %v1467
    %v1469 = vpop.f32.mrb[0].mxu0
    %v1470 = vpop.f32.mrb[0].mxu0
    %v1471 = vpop.f32.mrb[0].mxu0
    %1472 = vdwg.mxu0
    %1474 = vrot.lane.b32.xlu0 %v830, 64
    %v1475 = vpop.permute.xlu0 %1474
    %v1480 = vunpack.c.l.b16 %v560
    %v1481 = vunpack.c.l.b16 %v561
    %v1482 = vunpack.c.l.b16 %v562
    %v1483 = vunpack.c.l.b16 %v563
    %v1484 = vpack.c.b16 %v1481, %v1480
    %v1485 = vpack.c.b16 %v1483, %v1482
    %v1489 = vsel %vm247, %v1475, 0
    %1491 = vmatprep.subr.bf16.mxu0 0
    %1492 = vmatpush1.bf16.msra.mxu0 %v1484
    %1493 = vmatprep.subr.bf16.mxu0 0
    %1494 = vmatpush1.bf16.msra.mxu0 %v1485
    %1495 = vmatprep.subr.bf16.mxu0 0
    %1496 = vmatpush1.bf16.msra.mxu0 0
    %1497 = vmatprep.subr.bf16.mxu0 0
    %1498 = vmatpush1.bf16.msra.mxu0 0
    %1499 = vmatprep.subr.bf16.mxu0 0
    %1500 = vmatpush1.bf16.msra.mxu0 0
    %1501 = vmatprep.subr.bf16.mxu0 0
    %1502 = vmatpush1.bf16.msra.mxu0 0
    %1503 = vmatprep.subr.bf16.mxu0 0
    %1504 = vmatpush1.bf16.msra.mxu0 0
    %1505 = vmatprep.subr.bf16.mxu0 0
    %1506 = vmatpush1.bf16.msra.mxu0 0
    %1507 = vmatprep.subr.bf16.mxu0 0
    %1508 = vmatpush1.bf16.msra.mxu0 0
    %1509 = vmatprep.subr.bf16.mxu0 0
    %1510 = vmatpush1.bf16.msra.mxu0 0
    %1511 = vmatprep.subr.bf16.mxu0 0
    %1512 = vmatpush1.bf16.msra.mxu0 0
    %1513 = vmatprep.subr.bf16.mxu0 0
    %1514 = vmatpush1.bf16.msra.mxu0 0
    %1515 = vmatprep.subr.bf16.mxu0 0
    %1516 = vmatpush1.bf16.msra.mxu0 0
    %1517 = vmatprep.subr.bf16.mxu0 0
    %1518 = vmatpush1.bf16.msra.mxu0 0
    %1519 = vmatprep.subr.bf16.mxu0 0
    %1520 = vmatpush1.bf16.msra.mxu0 0
    %1521 = vmatprep.subr.bf16.mxu0 0
    %1522 = vmatpush1.bf16.msra.mxu0 0
    %1523 = vmatprep.mubr.bf16.mxu0 0
    %1524 = vmatmul.mubr.bf16.gmra.mrb[0].mxu0 %v1489
    %v1525 = vpop.f32.mrb[0].mxu0
    %v1526 = vadd.f32 0.0, %v1525
    %v1527 = vpop.f32.mrb[0].mxu0
    %v1528 = vpop.f32.mrb[0].mxu0
    %v1529 = vpop.f32.mrb[0].mxu0
    %1530 = vdwg.mxu0
    %1532 = vrot.lane.b32.xlu0 %v831, 64
    %v1533 = vpop.permute.xlu0 %1532
    %v1538 = vunpack.c.l.b16 %v564
    %v1539 = vunpack.c.l.b16 %v565
    %v1540 = vunpack.c.l.b16 %v566
    %v1541 = vunpack.c.l.b16 %v567
    %v1542 = vpack.c.b16 %v1539, %v1538
    %v1543 = vpack.c.b16 %v1541, %v1540
    %v1547 = vsel %vm247, %v1533, 0
    %1549 = vmatprep.subr.bf16.mxu0 0
    %1550 = vmatpush1.bf16.msra.mxu0 %v1542
    %1551 = vmatprep.subr.bf16.mxu0 0
    %1552 = vmatpush1.bf16.msra.mxu0 %v1543
    %1553 = vmatprep.subr.bf16.mxu0 0
    %1554 = vmatpush1.bf16.msra.mxu0 0
    %1555 = vmatprep.subr.bf16.mxu0 0
    %1556 = vmatpush1.bf16.msra.mxu0 0
    %1557 = vmatprep.subr.bf16.mxu0 0
    %1558 = vmatpush1.bf16.msra.mxu0 0
    %1559 = vmatprep.subr.bf16.mxu0 0
    %1560 = vmatpush1.bf16.msra.mxu0 0
    %1561 = vmatprep.subr.bf16.mxu0 0
    %1562 = vmatpush1.bf16.msra.mxu0 0
    %1563 = vmatprep.subr.bf16.mxu0 0
    %1564 = vmatpush1.bf16.msra.mxu0 0
    %1565 = vmatprep.subr.bf16.mxu0 0
    %1566 = vmatpush1.bf16.msra.mxu0 0
    %1567 = vmatprep.subr.bf16.mxu0 0
    %1568 = vmatpush1.bf16.msra.mxu0 0
    %1569 = vmatprep.subr.bf16.mxu0 0
    %1570 = vmatpush1.bf16.msra.mxu0 0
    %1571 = vmatprep.subr.bf16.mxu0 0
    %1572 = vmatpush1.bf16.msra.mxu0 0
    %1573 = vmatprep.subr.bf16.mxu0 0
    %1574 = vmatpush1.bf16.msra.mxu0 0
    %1575 = vmatprep.subr.bf16.mxu0 0
    %1576 = vmatpush1.bf16.msra.mxu0 0
    %1577 = vmatprep.subr.bf16.mxu0 0
    %1578 = vmatpush1.bf16.msra.mxu0 0
    %1579 = vmatprep.subr.bf16.mxu0 0
    %1580 = vmatpush1.bf16.msra.mxu0 0
    %1581 = vmatprep.mubr.bf16.mxu0 0
    %1582 = vmatmul.mubr.bf16.gmra.mrb[0].mxu0 %v1547
    %v1583 = vpop.f32.mrb[0].mxu0
    %v1584 = vadd.f32 0.0, %v1583
    %v1585 = vpop.f32.mrb[0].mxu0
    %v1586 = vpop.f32.mrb[0].mxu0
    %v1587 = vpop.f32.mrb[0].mxu0
    %1588 = vdwg.mxu0
    %1590 = vrot.lane.b32.xlu0 %v832, 64
    %v1591 = vpop.permute.xlu0 %1590
    %v1596 = vunpack.c.l.b16 %v568
    %v1597 = vunpack.c.l.b16 %v569
    %v1598 = vunpack.c.l.b16 %v570
    %v1599 = vunpack.c.l.b16 %v571
    %v1600 = vpack.c.b16 %v1597, %v1596
    %v1601 = vpack.c.b16 %v1599, %v1598
    %v1605 = vsel %vm247, %v1591, 0
    %1607 = vmatprep.subr.bf16.mxu0 0
    %1608 = vmatpush1.bf16.msra.mxu0 %v1600
    %1609 = vmatprep.subr.bf16.mxu0 0
    %1610 = vmatpush1.bf16.msra.mxu0 %v1601
    %1611 = vmatprep.subr.bf16.mxu0 0
    %1612 = vmatpush1.bf16.msra.mxu0 0
    %1613 = vmatprep.subr.bf16.mxu0 0
    %1614 = vmatpush1.bf16.msra.mxu0 0
    %1615 = vmatprep.subr.bf16.mxu0 0
    %1616 = vmatpush1.bf16.msra.mxu0 0
    %1617 = vmatprep.subr.bf16.mxu0 0
    %1618 = vmatpush1.bf16.msra.mxu0 0
    %1619 = vmatprep.subr.bf16.mxu0 0
    %1620 = vmatpush1.bf16.msra.mxu0 0
    %1621 = vmatprep.subr.bf16.mxu0 0
    %1622 = vmatpush1.bf16.msra.mxu0 0
    %1623 = vmatprep.subr.bf16.mxu0 0
    %1624 = vmatpush1.bf16.msra.mxu0 0
    %1625 = vmatprep.subr.bf16.mxu0 0
    %1626 = vmatpush1.bf16.msra.mxu0 0
    %1627 = vmatprep.subr.bf16.mxu0 0
    %1628 = vmatpush1.bf16.msra.mxu0 0
    %1629 = vmatprep.subr.bf16.mxu0 0
    %1630 = vmatpush1.bf16.msra.mxu0 0
    %1631 = vmatprep.subr.bf16.mxu0 0
    %1632 = vmatpush1.bf16.msra.mxu0 0
    %1633 = vmatprep.subr.bf16.mxu0 0
    %1634 = vmatpush1.bf16.msra.mxu0 0
    %1635 = vmatprep.subr.bf16.mxu0 0
    %1636 = vmatpush1.bf16.msra.mxu0 0
    %1637 = vmatprep.subr.bf16.mxu0 0
    %1638 = vmatpush1.bf16.msra.mxu0 0
    %1639 = vmatprep.mubr.bf16.mxu0 0
    %1640 = vmatmul.mubr.bf16.gmra.mrb[0].mxu0 %v1605
    %v1641 = vpop.f32.mrb[0].mxu0
    %v1642 = vadd.f32 0.0, %v1641
    %v1643 = vpop.f32.mrb[0].mxu0
    %v1644 = vpop.f32.mrb[0].mxu0
    %v1645 = vpop.f32.mrb[0].mxu0
    %1646 = vdwg.mxu0
    %1648 = vrot.lane.b32.xlu0 %v833, 64
    %v1649 = vpop.permute.xlu0 %1648
    %v1654 = vunpack.c.l.b16 %v572
    %v1655 = vunpack.c.l.b16 %v573
    %v1656 = vunpack.c.l.b16 %v574
    %v1657 = vunpack.c.l.b16 %v575
    %v1658 = vpack.c.b16 %v1655, %v1654
    %v1659 = vpack.c.b16 %v1657, %v1656
    %v1663 = vsel %vm247, %v1649, 0
    %1665 = vmatprep.subr.bf16.mxu0 0
    %1666 = vmatpush1.bf16.msra.mxu0 %v1658
    %1667 = vmatprep.subr.bf16.mxu0 0
    %1668 = vmatpush1.bf16.msra.mxu0 %v1659
    %1669 = vmatprep.subr.bf16.mxu0 0
    %1670 = vmatpush1.bf16.msra.mxu0 0
    %1671 = vmatprep.subr.bf16.mxu0 0
    %1672 = vmatpush1.bf16.msra.mxu0 0
    %1673 = vmatprep.subr.bf16.mxu0 0
    %1674 = vmatpush1.bf16.msra.mxu0 0
    %1675 = vmatprep.subr.bf16.mxu0 0
    %1676 = vmatpush1.bf16.msra.mxu0 0
    %1677 = vmatprep.subr.bf16.mxu0 0
    %1678 = vmatpush1.bf16.msra.mxu0 0
    %1679 = vmatprep.subr.bf16.mxu0 0
    %1680 = vmatpush1.bf16.msra.mxu0 0
    %1681 = vmatprep.subr.bf16.mxu0 0
    %1682 = vmatpush1.bf16.msra.mxu0 0
    %1683 = vmatprep.subr.bf16.mxu0 0
    %1684 = vmatpush1.bf16.msra.mxu0 0
    %1685 = vmatprep.subr.bf16.mxu0 0
    %1686 = vmatpush1.bf16.msra.mxu0 0
    %1687 = vmatprep.subr.bf16.mxu0 0
    %1688 = vmatpush1.bf16.msra.mxu0 0
    %1689 = vmatprep.subr.bf16.mxu0 0
    %1690 = vmatpush1.bf16.msra.mxu0 0
    %1691 = vmatprep.subr.bf16.mxu0 0
    %1692 = vmatpush1.bf16.msra.mxu0 0
    %1693 = vmatprep.subr.bf16.mxu0 0
    %1694 = vmatpush1.bf16.msra.mxu0 0
    %1695 = vmatprep.subr.bf16.mxu0 0
    %1696 = vmatpush1.bf16.msra.mxu0 0
    %1697 = vmatprep.mubr.bf16.mxu0 0
    %1698 = vmatmul.mubr.bf16.gmra.mrb[0].mxu0 %v1663
    %v1699 = vpop.f32.mrb[0].mxu0
    %v1700 = vadd.f32 0.0, %v1699
    %v1701 = vpop.f32.mrb[0].mxu0
    %v1702 = vpop.f32.mrb[0].mxu0
    %v1703 = vpop.f32.mrb[0].mxu0
    %1704 = vdwg.mxu0
    %1706 = vrot.lane.b32.xlu0 %v834, 64
    %v1707 = vpop.permute.xlu0 %1706
    %v1712 = vunpack.c.l.b16 %v576
    %v1713 = vunpack.c.l.b16 %v577
    %v1714 = vunpack.c.l.b16 %v578
    %v1715 = vunpack.c.l.b16 %v579
    %v1716 = vpack.c.b16 %v1713, %v1712
    %v1717 = vpack.c.b16 %v1715, %v1714
    %v1721 = vsel %vm247, %v1707, 0
    %1723 = vmatprep.subr.bf16.mxu0 0
    %1724 = vmatpush1.bf16.msra.mxu0 %v1716
    %1725 = vmatprep.subr.bf16.mxu0 0
    %1726 = vmatpush1.bf16.msra.mxu0 %v1717
    %1727 = vmatprep.subr.bf16.mxu0 0
    %1728 = vmatpush1.bf16.msra.mxu0 0
    %1729 = vmatprep.subr.bf16.mxu0 0
    %1730 = vmatpush1.bf16.msra.mxu0 0
    %1731 = vmatprep.subr.bf16.mxu0 0
    %1732 = vmatpush1.bf16.msra.mxu0 0
    %1733 = vmatprep.subr.bf16.mxu0 0
    %1734 = vmatpush1.bf16.msra.mxu0 0
    %1735 = vmatprep.subr.bf16.mxu0 0
    %1736 = vmatpush1.bf16.msra.mxu0 0
    %1737 = vmatprep.subr.bf16.mxu0 0
    %1738 = vmatpush1.bf16.msra.mxu0 0
    %1739 = vmatprep.subr.bf16.mxu0 0
    %1740 = vmatpush1.bf16.msra.mxu0 0
    %1741 = vmatprep.subr.bf16.mxu0 0
    %1742 = vmatpush1.bf16.msra.mxu0 0
    %1743 = vmatprep.subr.bf16.mxu0 0
    %1744 = vmatpush1.bf16.msra.mxu0 0
    %1745 = vmatprep.subr.bf16.mxu0 0
    %1746 = vmatpush1.bf16.msra.mxu0 0
    %1747 = vmatprep.subr.bf16.mxu0 0
    %1748 = vmatpush1.bf16.msra.mxu0 0
    %1749 = vmatprep.subr.bf16.mxu0 0
    %1750 = vmatpush1.bf16.msra.mxu0 0
    %1751 = vmatprep.subr.bf16.mxu0 0
    %1752 = vmatpush1.bf16.msra.mxu0 0
    %1753 = vmatprep.subr.bf16.mxu0 0
    %1754 = vmatpush1.bf16.msra.mxu0 0
    %1755 = vmatprep.mubr.bf16.mxu0 0
    %1756 = vmatmul.mubr.bf16.gmra.mrb[0].mxu0 %v1721
    %v1757 = vpop.f32.mrb[0].mxu0
    %v1758 = vadd.f32 0.0, %v1757
    %v1759 = vpop.f32.mrb[0].mxu0
    %v1760 = vpop.f32.mrb[0].mxu0
    %v1761 = vpop.f32.mrb[0].mxu0
    %1762 = vdwg.mxu0
    %v1763 = vxor.u32 %v1352, 2147483648
    %v1764 = vxor.u32 %v1410, 2147483648
    %v1765 = vxor.u32 %v1468, 2147483648
    %v1766 = vxor.u32 %v1526, 2147483648
    %v1767 = vxor.u32 %v1584, 2147483648
    %v1768 = vxor.u32 %v1642, 2147483648
    %v1769 = vxor.u32 %v1700, 2147483648
    %v1770 = vxor.u32 %v1758, 2147483648
    %v1771 = vmul.f32 %v1763, 1.442695
    %v1772 = vpow.pop %v1771
    %v1773 = vmul.f32 %v1764, 1.442695
    %v1774 = vpow.pop %v1773
    %v1775 = vmul.f32 %v1765, 1.442695
    %v1776 = vpow.pop %v1775
    %v1777 = vmul.f32 %v1766, 1.442695
    %v1778 = vpow.pop %v1777
    %v1779 = vmul.f32 %v1767, 1.442695
    %v1780 = vpow.pop %v1779
    %v1781 = vmul.f32 %v1768, 1.442695
    %v1782 = vpow.pop %v1781
    %v1783 = vmul.f32 %v1769, 1.442695
    %v1784 = vpow.pop %v1783
    %v1785 = vmul.f32 %v1770, 1.442695
    %v1786 = vpow.pop %v1785
    %v1787 = vadd.f32 %v1772, 1.0
    %v1788 = vadd.f32 %v1774, 1.0
    %v1789 = vadd.f32 %v1776, 1.0
    %v1790 = vadd.f32 %v1778, 1.0
    %v1791 = vadd.f32 %v1780, 1.0
    %v1792 = vadd.f32 %v1782, 1.0
    %v1793 = vadd.f32 %v1784, 1.0
    %v1794 = vadd.f32 %v1786, 1.0
    %v1795 = vrcp.pop %v1787
    %v1796 = vmul.f32 1.0, %v1795
    %v1797 = vrcp.pop %v1788
    %v1798 = vmul.f32 1.0, %v1797
    %v1799 = vrcp.pop %v1789
    %v1800 = vmul.f32 1.0, %v1799
    %v1801 = vrcp.pop %v1790
    %v1802 = vmul.f32 1.0, %v1801
    %v1803 = vrcp.pop %v1791
    %v1804 = vmul.f32 1.0, %v1803
    %v1805 = vrcp.pop %v1792
    %v1806 = vmul.f32 1.0, %v1805
    %v1807 = vrcp.pop %v1793
    %v1808 = vmul.f32 1.0, %v1807
    %v1809 = vrcp.pop %v1794
    %v1810 = vmul.f32 1.0, %v1809
    %v1819 = vrot.slane %v1352, 1
    %v1820 = vrot.slane %v1410, 1
    %v1821 = vrot.slane %v1468, 1
    %v1822 = vrot.slane %v1526, 1
    %v1823 = vrot.slane %v1584, 1
    %v1824 = vrot.slane %v1642, 1
    %v1825 = vrot.slane %v1700, 1
    %v1826 = vrot.slane %v1758, 1
    %v1835 = vmul.f32 %v1796, %v1819
    %v1836 = vmul.f32 %v1798, %v1820
    %v1837 = vmul.f32 %v1800, %v1821
    %v1838 = vmul.f32 %v1802, %v1822
    %v1839 = vmul.f32 %v1804, %v1823
    %v1840 = vmul.f32 %v1806, %v1824
    %v1841 = vmul.f32 %v1808, %v1825
    %v1842 = vmul.f32 %v1810, %v1826
    %v1843 = vsub.f32 1.0, %v1796
    %v1844 = vsub.f32 1.0, %v1798
    %v1845 = vsub.f32 1.0, %v1800
    %v1846 = vsub.f32 1.0, %v1802
    %v1847 = vsub.f32 1.0, %v1804
    %v1848 = vsub.f32 1.0, %v1806
    %v1849 = vsub.f32 1.0, %v1808
    %v1850 = vsub.f32 1.0, %v1810
    %v1859 = vrot.slane %v888, 1
    %v1860 = vrot.slane %v946, 1
    %v1861 = vrot.slane %v1004, 1
    %v1862 = vrot.slane %v1062, 1
    %v1863 = vrot.slane %v1120, 1
    %v1864 = vrot.slane %v1178, 1
    %v1865 = vrot.slane %v1236, 1
    %v1866 = vrot.slane %v1294, 1
    %v1875 = vmul.f32 %v1843, %v1859
    %v1876 = vmul.f32 %v1844, %v1860
    %v1877 = vmul.f32 %v1845, %v1861
    %v1878 = vmul.f32 %v1846, %v1862
    %v1879 = vmul.f32 %v1847, %v1863
    %v1880 = vmul.f32 %v1848, %v1864
    %v1881 = vmul.f32 %v1849, %v1865
    %v1882 = vmul.f32 %v1850, %v1866
    %v1883 = vadd.f32 %v1835, %v1875
    %v1884 = vadd.f32 %v1836, %v1876
    %v1885 = vadd.f32 %v1837, %v1877
    %v1886 = vadd.f32 %v1838, %v1878
    %v1887 = vadd.f32 %v1839, %v1879
    %v1888 = vadd.f32 %v1840, %v1880
    %v1889 = vadd.f32 %v1841, %v1881
    %v1890 = vadd.f32 %v1842, %v1882
    %v1891 = vld [vmem:[#allocation8] sm:$0xff]
    %v1892 = vld [vmem:[%s10] sm:$0x1]
    %v1894 = vlaneseq
    %v1895 = vshrl.u32 %v1894, 7
    %v1896 = vsub.s32 0, %v1895
    %v1897 = vrot.slane %v1892, %v1896
    %1898 = vrot.lane.b32.xlu0 %v1897, 32
    %v1899 = vpop.permute.xlu0 %1898
    %v1901 = vmul.f32 %v86, %v1899
    %1903 = vrot.lane.b32.xlu0 %v1901, 96
    %v1904 = vpop.permute.xlu0 %1903
    %v1906 = vsel %vm472, %v1904, 0.0
    %1907 = vadd.xlane.f32.xlu0 %v1906
    %v1908 = vpop.xlane.xlu0 %1907
    %v1909 = vld [vmem:[#allocation2] sm:$0x1]
    %v1911 = vlaneseq
    %v1912 = vshrl.u32 %v1911, 7
    %v1913 = vsub.s32 0, %v1912
    %v1914 = vrot.slane %v1909, %v1913
    %v1916 = vadd.f32 %v1908, %v1914
    %v1917 = vxor.u32 %v1916, 2147483648
    %v1918 = vmul.f32 %v1917, 1.442695
    %v1919 = vpow.pop %v1918
    %v1920 = vadd.f32 %v1919, 1.0
    %v1921 = vrcp.pop %v1920
    %v1922 = vmul.f32 1.0, %v1921
    %v1923 = vmax.f32 %v1891, 0.0
    %v1924 = vrot.slane %v946, 7
    %vm1925 = vcmask 1041409
    %v1926 = vsel %vm1925, %v1924, %v888
    %v1927 = vrot.slane %v1004, 6
    %vm1928 = vcmask 1042434
    %v1929 = vsel %vm1928, %v1927, %v1926
    %v1930 = vrot.slane %v1062, 5
    %vm1931 = vcmask 1043459
    %v1932 = vsel %vm1931, %v1930, %v1929
    %v1933 = vrot.slane %v1120, 4
    %vm1934 = vcmask 1044484
    %v1935 = vsel %vm1934, %v1933, %v1932
    %v1936 = vrot.slane %v1178, 3
    %vm1937 = vcmask 1045509
    %v1938 = vsel %vm1937, %v1936, %v1935
    %v1939 = vrot.slane %v1236, 2
    %vm1940 = vcmask 1046534
    %v1941 = vsel %vm1940, %v1939, %v1938
    %vm1942 = vcmask 1047559
    %v1943 = vsel %vm1942, %v1866, %v1941
    %v1945 = vmul.f32 %v1923, %v1943
    %1947 = vset.pattern.permute.xlu0 0
    %1948 = vperm.xlu0 %1947, %v1922
    %v1949 = vpop.permute.xlu0 %1948
    %v1951 = vmul.f32 %v1949, %v1945
    %v1953 = vrot.slane %v1951, 1
    %v1954 = vrot.slane %v1951, 2
    %v1955 = vrot.slane %v1951, 3
    %v1956 = vrot.slane %v1951, 4
    %v1957 = vrot.slane %v1951, 5
    %v1958 = vrot.slane %v1951, 6
    %v1959 = vrot.slane %v1951, 7
    %v1968 = vadd.f32 %v1883, %v1951
    %v1969 = vadd.f32 %v1884, %v1953
    %v1970 = vadd.f32 %v1885, %v1954
    %v1971 = vadd.f32 %v1886, %v1955
    %v1972 = vadd.f32 %v1887, %v1956
    %v1973 = vadd.f32 %v1888, %v1957
    %v1974 = vadd.f32 %v1889, %v1958
    %v1975 = vadd.f32 %v1890, %v1959
    %vm1976 = vcmp.lt.f32.partialorder %v1891, 0.0
    %v1985 = vrot.slane %v1969, 7
    %v1986 = vsel %vm1925, %v1985, %v1968
    %v1987 = vrot.slane %v1970, 6
    %v1988 = vsel %vm1928, %v1987, %v1986
    %v1989 = vrot.slane %v1971, 5
    %v1990 = vsel %vm1931, %v1989, %v1988
    %v1991 = vrot.slane %v1972, 4
    %v1992 = vsel %vm1934, %v1991, %v1990
    %v1993 = vrot.slane %v1973, 3
    %v1994 = vsel %vm1937, %v1993, %v1992
    %v1995 = vrot.slane %v1974, 2
    %v1996 = vsel %vm1940, %v1995, %v1994
    %v1997 = vrot.slane %v1975, 1
    %v1998 = vsel %vm1942, %v1997, %v1996
    %v2000 = vsel %vm1976, -1e+10, %v1998
    %2001 = vmax.xlane.f32.xlu0 %v2000
    %v2002 = vpop.xlane.xlu0 %2001
    %v2003 = vsub.f32 %v2000, %v2002
    %v2004 = vmul.f32 %v2003, 1.442695
    %v2005 = vpow.pop %v2004
    %2006 = vadd.xlane.f32.xlu0 %v2005
    %v2007 = vpop.xlane.xlu0 %2006
    %v2008 = vlog2.pop %v2007
    %v2009 = vmul.f32 %v2008, 0.6931472
    %v2010 = vsub.f32 %v2003, %v2009
    %2011 = vst [vmem:[#allocation9] sm:$0xff] %v2010
    // Predicated region
    $region62: #{tpu_custom_call.1} parent=1 // pred_check
      _
    $region63: #{tpu_custom_call.1} parent=1 // pred_check_branch
      %2013 = sbr.rel (0) target = $region65
    $region64: #{tpu_custom_call.1} parent=1 // pred_region
      %s2015 = ssub.s32 128, 128
      %2016 = vsyncadd [#allocation5], %s2015
      %s2018 = sshll.u32 [#allocation9], 4
      %s2019 = int_to_ptr.vmem [resolvable:$true] %s2018
      %2021 = dma.vmem_to_hbm [thread:$0]  %s2019, 128, %s12, [#allocation5]
    $region65: #{tpu_custom_call.1} parent=1 // pred_fallthru
      _
    // Predicated region
    $region66: #{tpu_custom_call.1} parent=1 // pred_check
      _
    $region67: #{tpu_custom_call.1} parent=1 // pred_check_branch
      %2023 = sbr.rel (0) target = $region69
    $region68: #{tpu_custom_call.1} parent=1 // pred_region
      %s2025 = ssub.s32 128, 128
      %2026 = vsyncadd [#allocation11], %s2025
      %s2028 = sshll.u32 [#allocation10], 4
      %s2029 = int_to_ptr.vmem [resolvable:$true] %s2028
      %2031 = dma.vmem_to_hbm [thread:$0]  %s2029, 128, %s13, [#allocation11]
    $region69: #{tpu_custom_call.1} parent=1 // pred_fallthru
      _
    // Predicated region
    $region70: #{tpu_custom_call.1} parent=1 // pred_check
      _
    $region71: #{tpu_custom_call.1} parent=1 // pred_check_branch
      %2033 = sbr.rel (0) target = $region73
    $region72: #{tpu_custom_call.1} parent=1 // pred_region
      %2034 = dma.done [#allocation5], 128
    $region73: #{tpu_custom_call.1} parent=1 // pred_fallthru
      _
    // Predicated region
    $region74: #{tpu_custom_call.1} parent=1 // pred_check
      _
    $region75: #{tpu_custom_call.1} parent=1 // pred_check_branch
      %2036 = sbr.rel (0) target = $region77
    $region76: #{tpu_custom_call.1} parent=1 // pred_region
      %2037 = dma.done [#allocation11], 128
    $region77: #{tpu_custom_call.1} parent=1 // pred_fallthru
      _
    %2038 = vsyncpa [#allocation4], 1
    %2039 = vsyncpa [#allocation7], 1
    %2040 = vsyncpa [#allocation5], 1
    %2041 = vsyncpa [#allocation11], 1

</llo_original>
